<compile_context>
chip_gen: v5e
topology: v5e:2x2
jax: 0.10.0
libtpu: 0.0.40
codegen_flags: <defaults>
</compile_context>

<pallas_src>
import functools

import jax
import jax.numpy as jnp
from jax.experimental import pallas as pl
from jax.experimental.pallas import tpu as pltpu

LN_EPS = 1e-12          # BERT LayerNorm eps
PAIR_EPS = 1e-6         # torch F.pairwise_distance default eps
SEP_TOKEN_ID = 102
FF_CHUNK = 512          # FFN F-dim tile: bounds the live (rows, F) intermediate


def _gelu(x):
    c = 0.7978845608028654  # sqrt(2/pi)
    return 0.5 * x * (1.0 + jnp.tanh(c * (x + 0.044715 * x * x * x)))


def _layer_norm(x, g, b):
    mu = jnp.mean(x, axis=-1, keepdims=True)
    var = jnp.mean((x - mu) ** 2, axis=-1, keepdims=True)
    return (x - mu) * jax.lax.rsqrt(var + LN_EPS) * g + b


# Rows of the concatenated (9, H) bias / LayerNorm parameter slab.
_BQ, _BK, _BV, _BO, _LN1G, _LN1B, _B2, _LN2G, _LN2B = range(9)


# ----------------------------------------------------------------------------
# Fused kernel: BERT layer -> segment mean pooling -> per-row contrastive loss.
# Grid is over batch tiles of TB rows; weights live whole in VMEM.
# ----------------------------------------------------------------------------
def fused_kernel(x_ref, mask_ref, sep_ref, lab_ref,
                 wqkv_ref, wo_ref, w1_ref, w2_ref, vec_ref, b1_ref,
                 u_ref, v_ref, loss_ref, *, margin):
    x = x_ref[...]                           # (TB, S, H) f32
    TB, S, H = x.shape
    F = w1_ref.shape[1]
    mask = mask_ref[...]                     # (TB, 1, S) f32
    sep = sep_ref[...]                       # (TB, 1, 1) int32
    lab = lab_ref[...]                       # (TB, 1, 1) f32
    vecs = vec_ref[...]                      # (9, H) f32  bias / LN slab
    b1 = b1_ref[...]                         # (1, F) f32
    bf16 = jnp.bfloat16
    scale = 1.0 / jnp.sqrt(jnp.float32(H))

    # ---- attention (flattened (TB*S, H) matmuls feed taller MXU tiles) ----
    xf = x.reshape(TB * S, H)
    qkv = jnp.dot(xf.astype(bf16), wqkv_ref[...],           # fused Wq|Wk|Wv
                  preferred_element_type=jnp.float32)        # (TB*S, 3H)
    q = (qkv[:, 0:H] + vecs[_BQ:_BQ + 1]).reshape(TB, S, H)
    k = (qkv[:, H:2 * H] + vecs[_BK:_BK + 1]).reshape(TB, S, H)
    v = (qkv[:, 2 * H:3 * H] + vecs[_BV:_BV + 1]).reshape(TB, S, H)

    scores = jnp.einsum("bqh,bkh->bqk", q.astype(bf16), k.astype(bf16),
                        preferred_element_type=jnp.float32) * scale
    scores = scores + (1.0 - mask) * -1e9                    # (TB,1,S) bcast
    scores = scores - jnp.max(scores, axis=-1, keepdims=True)
    p = jnp.exp(scores)
    p = p * pl.reciprocal(jnp.sum(p, axis=-1, keepdims=True), approx=True)

    ctx = jnp.einsum("bqk,bkh->bqh", p.astype(bf16), v.astype(bf16),
                     preferred_element_type=jnp.float32)     # (TB,S,H)
    attn = jnp.dot(ctx.reshape(TB * S, H).astype(bf16), wo_ref[...],
                   preferred_element_type=jnp.float32) + vecs[_BO:_BO + 1]

    h1 = _layer_norm(xf + attn, vecs[_LN1G:_LN1G + 1], vecs[_LN1B:_LN1B + 1])
    h1b = h1.astype(bf16)

    # ---- FFN, chunked over F so the live (rows, F) intermediate is bounded ----
    ff = jnp.zeros((TB * S, H), jnp.float32)
    tF = min(FF_CHUNK, F)
    for f0 in range(0, F, tF):
        f1 = min(f0 + tF, F)
        hc = jnp.dot(h1b, w1_ref[:, f0:f1],
                     preferred_element_type=jnp.float32) + b1[:, f0:f1]
        hc = _gelu(hc)
        ff = ff + jnp.dot(hc.astype(bf16), w2_ref[f0:f1, :],
                          preferred_element_type=jnp.float32)
    ff = ff + vecs[_B2:_B2 + 1]
    hidden = _layer_norm(h1 + ff, vecs[_LN2G:_LN2G + 1],
                         vecs[_LN2B:_LN2B + 1]).reshape(TB, S, H)

    # ---- SEP-based segment mean pooling (per-row (1,S)x(S,H) contractions) ----
    pos = jax.lax.broadcasted_iota(jnp.int32, (TB, 1, S), 2)
    mask_u = (pos < sep).astype(jnp.float32)                 # tokens [:sep)
    mask_v = 1.0 - mask_u                                    # tokens [sep:]
    cnt_u = jnp.maximum(sep.astype(jnp.float32), 1.0)        # guard sep==0
    cnt_v = jnp.maximum(jnp.float32(S) - sep.astype(jnp.float32), 1.0)
    u = jnp.einsum("bqs,bsh->bqh", mask_u, hidden,
                   preferred_element_type=jnp.float32)
    u = u * pl.reciprocal(cnt_u, approx=True)                # (TB,1,H)
    vv = jnp.einsum("bqs,bsh->bqh", mask_v, hidden,
                    preferred_element_type=jnp.float32)
    vv = vv * pl.reciprocal(cnt_v, approx=True)              # (TB,1,H)

    # ---- per-row contrastive loss ----
    diff = u - vv + PAIR_EPS                                 # torch pairwise eps
    d2 = jnp.sum(diff * diff, axis=-1, keepdims=True)        # (TB,1,1)
    d = jnp.sqrt(d2)
    neg = jnp.maximum(margin - d, 0.0)
    per_row = lab * d2 + (1.0 - lab) * neg * neg

    u_ref[...] = u
    v_ref[...] = vv
    loss_ref[...] = per_row


def _pick_batch_tile(B, S, H):
    # Largest divisor of B that keeps the x-block modest (<=2 MiB) while
    # leaving >=2 grid steps so v7x's second TensorCore is used.
    cap = max(1, (2 * 1024 * 1024) // max(1, S * H * 4))
    best = 1
    for tb in range(1, B + 1):
        if B % tb == 0 and tb <= cap and B // tb >= 2:
            best = tb
    return best


def bert_contrastive_forward(params, input_ids, attention_mask, labels=None,
                             margin=1.0, return_embeddings=False):
    B, S = input_ids.shape
    H = params["wq"].shape[0]
    F_ = params["w1"].shape[1]
    bf16 = jnp.bfloat16

    # glue: embedding gather + embedding LayerNorm (data-dependent gather)
    x = params["word_emb"][input_ids] + params["pos_emb"][None, :S, :]
    x = _layer_norm(x, params["emb_g"], params["emb_b"]).astype(jnp.float32)
    mask3 = attention_mask.astype(jnp.float32).reshape(B, 1, S)
    # glue: torch's (ids==102).nonzero()[1][::2] == first SEP per row
    sep3 = jnp.argmax((input_ids == SEP_TOKEN_ID).astype(jnp.int32),
                      axis=1).astype(jnp.int32).reshape(B, 1, 1)
    if labels is None:
        labels = jnp.zeros((B,), jnp.float32)
    lab3 = labels.astype(jnp.float32).reshape(B, 1, 1)

    # bf16 weight slabs (fused Wq|Wk|Wv) + one f32 bias/LN slab.
    wqkv = jnp.concatenate([params["wq"], params["wk"], params["wv"]],
                           axis=1).astype(bf16)              # (H, 3H)
    wo = params["wo"].astype(bf16)                            # (H, H)
    w1 = params["w1"].astype(bf16)                            # (H, F)
    w2 = params["w2"].astype(bf16)                            # (F, H)
    vec_slab = jnp.concatenate(
        [params["bq"], params["bk"], params["bv"], params["bo"],
         params["ln1_g"], params["ln1_b"], params["b2"],
         params["ln2_g"], params["ln2_b"]], axis=0).astype(jnp.float32)  # (9,H)
    b1 = params["b1"].astype(jnp.float32)                     # (1, F)

    TB = _pick_batch_tile(B, S, H)
    grid = (B // TB,)
    resident = pl.BlockSpec(memory_space=pltpu.MemorySpace.VMEM)  # single-buffered

    u, v, per_row = pl.pallas_call(
        functools.partial(fused_kernel, margin=margin),
        out_shape=(jax.ShapeDtypeStruct((B, 1, H), jnp.float32),
                   jax.ShapeDtypeStruct((B, 1, H), jnp.float32),
                   jax.ShapeDtypeStruct((B, 1, 1), jnp.float32)),
        grid=grid,
        in_specs=[
            pl.BlockSpec((TB, S, H), lambda b: (b, 0, 0)),   # x
            pl.BlockSpec((TB, 1, S), lambda b: (b, 0, 0)),   # attention mask
            pl.BlockSpec((TB, 1, 1), lambda b: (b, 0, 0)),   # sep positions
            pl.BlockSpec((TB, 1, 1), lambda b: (b, 0, 0)),   # labels
            resident, resident, resident, resident,          # wqkv, wo, w1, w2
            resident, resident,                               # bias slab, b1
        ],
        out_specs=(pl.BlockSpec((TB, 1, H), lambda b: (b, 0, 0)),
                   pl.BlockSpec((TB, 1, H), lambda b: (b, 0, 0)),
                   pl.BlockSpec((TB, 1, 1), lambda b: (b, 0, 0))),
        compiler_params=pltpu.CompilerParams(
            dimension_semantics=("parallel",),
            vmem_limit_bytes=48 * 1024 * 1024),
    )(x, mask3, sep3, lab3, wqkv, wo, w1, w2, vec_slab, b1)

    if return_embeddings:
        return u.reshape(B, H), v.reshape(B, H)
    return 0.5 * jnp.mean(per_row.reshape(B))


# ----------------------------------------------------------------------------
# Pure-JAX reference with the same numerical recipe (bf16 matmuls, f32 accum,
# f32 LayerNorm/softmax/GELU) for verification.
# ----------------------------------------------------------------------------
def reference_forward(params, input_ids, attention_mask, labels, margin=1.0):
    bf16, f32 = jnp.bfloat16, jnp.float32
    B, S = input_ids.shape
    x = params["word_emb"][input_ids] + params["pos_emb"][None, :S, :]
    x = _layer_norm(x, params["emb_g"], params["emb_b"]).astype(f32)
    m = attention_mask.astype(f32)
    H = x.shape[-1]

    xb = x.astype(bf16)
    q = jnp.einsum("bsh,hk->bsk", xb, params["wq"].astype(bf16),
                   preferred_element_type=f32) + params["bq"]
    k = jnp.einsum("bsh,hk->bsk", xb, params["wk"].astype(bf16),
                   preferred_element_type=f32) + params["bk"]
    v = jnp.einsum("bsh,hk->bsk", xb, params["wv"].astype(bf16),
                   preferred_element_type=f32) + params["bv"]
    s = jnp.einsum("bqh,bkh->bqk", q.astype(bf16), k.astype(bf16),
                   preferred_element_type=f32) / jnp.sqrt(jnp.float32(H))
    s = s + (1.0 - m)[:, None, :] * -1e9
    p = jax.nn.softmax(s, axis=-1)
    ctx = jnp.einsum("bqk,bkh->bqh", p.astype(bf16), v.astype(bf16),
                     preferred_element_type=f32)
    attn = jnp.einsum("bsh,hk->bsk", ctx.astype(bf16), params["wo"].astype(bf16),
                      preferred_element_type=f32) + params["bo"]
    h1 = _layer_norm(x + attn, params["ln1_g"], params["ln1_b"])
    ff = _gelu(jnp.einsum("bsh,hf->bsf", h1.astype(bf16),
                          params["w1"].astype(bf16),
                          preferred_element_type=f32) + params["b1"])
    ff2 = jnp.einsum("bsf,fh->bsh", ff.astype(bf16), params["w2"].astype(bf16),
                     preferred_element_type=f32) + params["b2"]
    hidden = _layer_norm(h1 + ff2, params["ln2_g"], params["ln2_b"])

    sep = jnp.argmax((input_ids == SEP_TOKEN_ID).astype(jnp.int32), axis=1)
    us, vs = [], []
    for i in range(B):
        pi = int(sep[i])
        us.append(jnp.mean(hidden[i, :pi, :], axis=0))
        vs.append(jnp.mean(hidden[i, pi:, :], axis=0))
    u = jnp.stack(us)
    v = jnp.stack(vs)
    diff = u - v + PAIR_EPS
    d = jnp.sqrt(jnp.sum(diff * diff, axis=-1))
    lbl = labels.astype(f32)
    pos = lbl * d * d
    neg = (1.0 - lbl) * jnp.maximum(margin - d, 0.0) ** 2
    return 0.5 * jnp.mean(pos + neg)


def init_params(key, vocab, max_pos, H, F_):
    ks = jax.random.split(key, 8)
    n = lambda k, shp: (0.02 * jax.random.normal(k, shp)).astype(jnp.float32)
    ones = lambda shp: jnp.ones(shp, jnp.float32)
    zeros = lambda shp: jnp.zeros(shp, jnp.float32)
    return {
        "word_emb": n(ks[0], (vocab, H)),
        "pos_emb": n(ks[1], (max_pos, H)),
        "emb_g": ones((1, H)), "emb_b": zeros((1, H)),
        "wq": n(ks[2], (H, H)), "bq": zeros((1, H)),
        "wk": n(ks[3], (H, H)), "bk": zeros((1, H)),
        "wv": n(ks[4], (H, H)), "bv": zeros((1, H)),
        "wo": n(ks[5], (H, H)), "bo": zeros((1, H)),
        "ln1_g": ones((1, H)), "ln1_b": zeros((1, H)),
        "w1": n(ks[6], (H, F_)), "b1": zeros((1, F_)),
        "w2": n(ks[7], (F_, H)), "b2": zeros((1, H)),
        "ln2_g": ones((1, H)), "ln2_b": zeros((1, H)),
    }


if __name__ == "__main__":
    B, S, H, F_ = 2, 8, 32, 128
    VOCAB, MAXPOS = 512, 64

    key = jax.random.PRNGKey(0)
    kp, kid = jax.random.split(key)
    params = init_params(kp, VOCAB, MAXPOS, H, F_)

    # input_ids: [CLS] ... [SEP] ... [SEP]  (two SEPs per row, like BERT pairs)
    input_ids = jax.random.randint(kid, (B, S), 200, 500, dtype=jnp.int32)
    input_ids = input_ids.at[0, 0].set(101).at[1, 0].set(101)
    input_ids = input_ids.at[0, 3].set(SEP_TOKEN_ID).at[0, 7].set(SEP_TOKEN_ID)
    input_ids = input_ids.at[1, 5].set(SEP_TOKEN_ID).at[1, 7].set(SEP_TOKEN_ID)
    attention_mask = jnp.ones((B, S), jnp.int32)
    labels = jnp.array([1.0, 0.0], jnp.float32)

    loss = jax.jit(bert_contrastive_forward)(params, input_ids, attention_mask,
                                             labels)
    loss = jax.block_until_ready(loss)

    ref = reference_forward(params, input_ids, attention_mask, labels)
    # bf16 matmuls + approx-reciprocal softmax/pooling => modest tolerance.
    assert jnp.allclose(loss, ref, rtol=2e-2, atol=2e-3), (float(loss), float(ref))

    print("KERNEL_OK")
</pallas_src>

<mosaic_0001>
module attributes {stable_mosaic.version = 11 : i64} {
  func.func @fused_kernel(%arg0: i32, %arg1: memref<1x8x32xf32, #tpu.memory_space<vmem>>, %arg2: memref<1x1x8xf32, #tpu.memory_space<vmem>>, %arg3: memref<1x1x1xi32, #tpu.memory_space<vmem>>, %arg4: memref<1x1x1xf32, #tpu.memory_space<vmem>>, %arg5: memref<32x96xbf16, #tpu.memory_space<vmem>>, %arg6: memref<32x32xbf16, #tpu.memory_space<vmem>>, %arg7: memref<32x128xbf16, #tpu.memory_space<vmem>>, %arg8: memref<128x32xbf16, #tpu.memory_space<vmem>>, %arg9: memref<9x32xf32, #tpu.memory_space<vmem>>, %arg10: memref<1x128xf32, #tpu.memory_space<vmem>>, %arg11: memref<1x1x32xf32, #tpu.memory_space<vmem>>, %arg12: memref<1x1x32xf32, #tpu.memory_space<vmem>>, %arg13: memref<1x1x1xf32, #tpu.memory_space<vmem>>) attributes {dimension_semantics = [#tpu.dimension_semantics<parallel>], iteration_bounds = array<i64: 2>, scalar_prefetch = 0 : i64, scratch_operands = 0 : i64, tpu.core_type = #tpu.core_type<tc>, window_params = [{transform_indices = @transform_0, window_bounds = array<i64: 1, 8, 32>}, {transform_indices = @transform_1, window_bounds = array<i64: 1, 1, 8>}, {transform_indices = @transform_2, window_bounds = array<i64: 1, 1, 1>}, {transform_indices = @transform_3, window_bounds = array<i64: 1, 1, 1>}, {pipeline_mode = #tpu.pipeline_mode<synchronous>, transform_indices = @transform_4, window_bounds = array<i64: 32, 96>}, {pipeline_mode = #tpu.pipeline_mode<synchronous>, transform_indices = @transform_5, window_bounds = array<i64: 32, 32>}, {pipeline_mode = #tpu.pipeline_mode<synchronous>, transform_indices = @transform_6, window_bounds = array<i64: 32, 128>}, {pipeline_mode = #tpu.pipeline_mode<synchronous>, transform_indices = @transform_7, window_bounds = array<i64: 128, 32>}, {pipeline_mode = #tpu.pipeline_mode<synchronous>, transform_indices = @transform_8, window_bounds = array<i64: 9, 32>}, {pipeline_mode = #tpu.pipeline_mode<synchronous>, transform_indices = @transform_9, window_bounds = array<i64: 1, 128>}, {transform_indices = @transform_10, window_bounds = array<i64: 1, 1, 32>}, {transform_indices = @transform_11, window_bounds = array<i64: 1, 1, 32>}, {transform_indices = @transform_12, window_bounds = array<i64: 1, 1, 1>}]} {
    %c0 = arith.constant 0 : index
    %c0_0 = arith.constant 0 : index
    %c0_1 = arith.constant 0 : index
    %0 = vector.load %arg1[%c0, %c0_0, %c0_1] : memref<1x8x32xf32, #tpu.memory_space<vmem>>, vector<1x8x32xf32>
    %c0_2 = arith.constant 0 : index
    %c0_3 = arith.constant 0 : index
    %c0_4 = arith.constant 0 : index
    %1 = vector.load %arg2[%c0_2, %c0_3, %c0_4] : memref<1x1x8xf32, #tpu.memory_space<vmem>>, vector<1x1x8xf32>
    %c0_5 = arith.constant 0 : index
    %c0_6 = arith.constant 0 : index
    %c0_7 = arith.constant 0 : index
    %2 = vector.load %arg3[%c0_5, %c0_6, %c0_7] : memref<1x1x1xi32, #tpu.memory_space<vmem>>, vector<1x1x1xi32>
    %c0_8 = arith.constant 0 : index
    %c0_9 = arith.constant 0 : index
    %c0_10 = arith.constant 0 : index
    %3 = vector.load %arg4[%c0_8, %c0_9, %c0_10] : memref<1x1x1xf32, #tpu.memory_space<vmem>>, vector<1x1x1xf32>
    %c0_11 = arith.constant 0 : index
    %c0_12 = arith.constant 0 : index
    %4 = vector.load %arg9[%c0_11, %c0_12] : memref<9x32xf32, #tpu.memory_space<vmem>>, vector<9x32xf32>
    %c0_13 = arith.constant 0 : index
    %c0_14 = arith.constant 0 : index
    %5 = vector.load %arg10[%c0_13, %c0_14] : memref<1x128xf32, #tpu.memory_space<vmem>>, vector<1x128xf32>
    %cst = arith.constant 3.200000e+01 : f32
    %6 = math.sqrt %cst : f32
    %cst_15 = arith.constant 1.000000e+00 : f32
    %7 = arith.divf %cst_15, %6 : f32
    %8 = vector.shape_cast %0 : vector<1x8x32xf32> to vector<8x32xf32>
    %9 = arith.truncf %8 : vector<8x32xf32> to vector<8x32xbf16>
    %c0_16 = arith.constant 0 : index
    %c0_17 = arith.constant 0 : index
    %10 = vector.load %arg5[%c0_16, %c0_17] : memref<32x96xbf16, #tpu.memory_space<vmem>>, vector<32x96xbf16>
    %cst_18 = arith.constant dense<0.000000e+00> : vector<8x96xf32>
    %11 = tpu.matmul %9, %10, %cst_18 {dimension_numbers = #tpu.dot_dimension_numbers<[1], [0], [0], [1], [0, 0, 1, 1], [], []>} : vector<8x32xbf16>, vector<32x96xbf16>, vector<8x96xf32> -> vector<8x96xf32>
    %12 = vector.extract_strided_slice %11 {offsets = [0, 0], sizes = [8, 32], strides = [1, 1]} : vector<8x96xf32> to vector<8x32xf32>
    %13 = vector.extract_strided_slice %4 {offsets = [0, 0], sizes = [1, 32], strides = [1, 1]} : vector<9x32xf32> to vector<1x32xf32>
    %14 = vector.broadcast %13 : vector<1x32xf32> to vector<8x32xf32>
    %15 = arith.addf %12, %14 : vector<8x32xf32>
    %16 = vector.shape_cast %15 : vector<8x32xf32> to vector<1x8x32xf32>
    %17 = vector.extract_strided_slice %11 {offsets = [0, 32], sizes = [8, 32], strides = [1, 1]} : vector<8x96xf32> to vector<8x32xf32>
    %18 = vector.extract_strided_slice %4 {offsets = [1, 0], sizes = [1, 32], strides = [1, 1]} : vector<9x32xf32> to vector<1x32xf32>
    %19 = vector.broadcast %18 : vector<1x32xf32> to vector<8x32xf32>
    %20 = arith.addf %17, %19 : vector<8x32xf32>
    %21 = vector.shape_cast %20 : vector<8x32xf32> to vector<1x8x32xf32>
    %22 = vector.extract_strided_slice %11 {offsets = [0, 64], sizes = [8, 32], strides = [1, 1]} : vector<8x96xf32> to vector<8x32xf32>
    %23 = vector.extract_strided_slice %4 {offsets = [2, 0], sizes = [1, 32], strides = [1, 1]} : vector<9x32xf32> to vector<1x32xf32>
    %24 = vector.broadcast %23 : vector<1x32xf32> to vector<8x32xf32>
    %25 = arith.addf %22, %24 : vector<8x32xf32>
    %26 = vector.shape_cast %25 : vector<8x32xf32> to vector<1x8x32xf32>
    %27 = arith.truncf %16 : vector<1x8x32xf32> to vector<1x8x32xbf16>
    %28 = arith.truncf %21 : vector<1x8x32xf32> to vector<1x8x32xbf16>
    "tpu.trace_start"() <{level = 10 : i32, message = "bqh,bkh->bqk"}> : () -> ()
    %cst_19 = arith.constant dense<0.000000e+00> : vector<1x8x8xf32>
    %29 = tpu.matmul %27, %28, %cst_19 {dimension_numbers = #tpu.dot_dimension_numbers<[2], [2], [1], [1], [0, 0, 0, 1, 1, 1], [0], [0]>} : vector<1x8x32xbf16>, vector<1x8x32xbf16>, vector<1x8x8xf32> -> vector<1x8x8xf32>
    "tpu.trace_stop"() : () -> ()
    %30 = vector.broadcast %7 : f32 to vector<1x8x8xf32>
    %31 = arith.mulf %29, %30 : vector<1x8x8xf32>
    %cst_20 = arith.constant 1.000000e+00 : f32
    %32 = vector.broadcast %cst_20 : f32 to vector<1x1x8xf32>
    %33 = arith.subf %32, %1 : vector<1x1x8xf32>
    %cst_21 = arith.constant -1.000000e+09 : f32
    %34 = vector.broadcast %cst_21 : f32 to vector<1x1x8xf32>
    %35 = arith.mulf %33, %34 : vector<1x1x8xf32>
    %36 = vector.broadcast %35 : vector<1x1x8xf32> to vector<1x8x8xf32>
    %37 = arith.addf %31, %36 : vector<1x8x8xf32>
    %cst_22 = arith.constant dense<0xFF800000> : vector<1x8xf32>
    %38 = vector.multi_reduction <maximumf>, %37, %cst_22 [2] : vector<1x8x8xf32> to vector<1x8xf32>
    %39 = vector.shape_cast %38 : vector<1x8xf32> to vector<1x8x1xf32>
    %40 = vector.broadcast %39 : vector<1x8x1xf32> to vector<1x8x8xf32>
    %41 = arith.subf %37, %40 : vector<1x8x8xf32>
    %42 = math.exp %41 : vector<1x8x8xf32>
    %cst_23 = arith.constant dense<0.000000e+00> : vector<1x8xf32>
    %43 = vector.multi_reduction <add>, %42, %cst_23 [2] : vector<1x8x8xf32> to vector<1x8xf32>
    %44 = vector.shape_cast %43 : vector<1x8xf32> to vector<1x8x1xf32>
    %45 = tpu.reciprocal %44 {approx = true} : vector<1x8x1xf32> -> vector<1x8x1xf32>
    %46 = vector.broadcast %45 : vector<1x8x1xf32> to vector<1x8x8xf32>
    %47 = arith.mulf %42, %46 : vector<1x8x8xf32>
    %48 = arith.truncf %47 : vector<1x8x8xf32> to vector<1x8x8xbf16>
    %49 = arith.truncf %26 : vector<1x8x32xf32> to vector<1x8x32xbf16>
    "tpu.trace_start"() <{level = 10 : i32, message = "bqk,bkh->bqh"}> : () -> ()
    %cst_24 = arith.constant dense<0.000000e+00> : vector<1x8x32xf32>
    %50 = tpu.matmul %48, %49, %cst_24 {dimension_numbers = #tpu.dot_dimension_numbers<[2], [1], [1], [2], [0, 0, 0, 1, 1, 2], [0], [0]>} : vector<1x8x8xbf16>, vector<1x8x32xbf16>, vector<1x8x32xf32> -> vector<1x8x32xf32>
    "tpu.trace_stop"() : () -> ()
    %51 = vector.shape_cast %50 : vector<1x8x32xf32> to vector<8x32xf32>
    %52 = arith.truncf %51 : vector<8x32xf32> to vector<8x32xbf16>
    %c0_25 = arith.constant 0 : index
    %c0_26 = arith.constant 0 : index
    %53 = vector.load %arg6[%c0_25, %c0_26] : memref<32x32xbf16, #tpu.memory_space<vmem>>, vector<32x32xbf16>
    %cst_27 = arith.constant dense<0.000000e+00> : vector<8x32xf32>
    %54 = tpu.matmul %52, %53, %cst_27 {dimension_numbers = #tpu.dot_dimension_numbers<[1], [0], [0], [1], [0, 0, 1, 1], [], []>} : vector<8x32xbf16>, vector<32x32xbf16>, vector<8x32xf32> -> vector<8x32xf32>
    %55 = vector.extract_strided_slice %4 {offsets = [3, 0], sizes = [1, 32], strides = [1, 1]} : vector<9x32xf32> to vector<1x32xf32>
    %56 = vector.broadcast %55 : vector<1x32xf32> to vector<8x32xf32>
    %57 = arith.addf %54, %56 : vector<8x32xf32>
    %58 = arith.addf %8, %57 : vector<8x32xf32>
    %59 = vector.extract_strided_slice %4 {offsets = [4, 0], sizes = [1, 32], strides = [1, 1]} : vector<9x32xf32> to vector<1x32xf32>
    %60 = vector.extract_strided_slice %4 {offsets = [5, 0], sizes = [1, 32], strides = [1, 1]} : vector<9x32xf32> to vector<1x32xf32>
    %cst_28 = arith.constant dense<0.000000e+00> : vector<8xf32>
    %61 = vector.multi_reduction <add>, %58, %cst_28 [1] : vector<8x32xf32> to vector<8xf32>
    %62 = vector.shape_cast %61 : vector<8xf32> to vector<8x1xf32>
    %cst_29 = arith.constant 3.200000e+01 : f32
    %63 = vector.broadcast %cst_29 : f32 to vector<8x1xf32>
    %64 = arith.divf %62, %63 : vector<8x1xf32>
    %65 = vector.broadcast %64 : vector<8x1xf32> to vector<8x32xf32>
    %66 = arith.subf %58, %65 : vector<8x32xf32>
    %67 = arith.mulf %66, %66 : vector<8x32xf32>
    %cst_30 = arith.constant dense<0.000000e+00> : vector<8xf32>
    %68 = vector.multi_reduction <add>, %67, %cst_30 [1] : vector<8x32xf32> to vector<8xf32>
    %69 = vector.shape_cast %68 : vector<8xf32> to vector<8x1xf32>
    %cst_31 = arith.constant 3.200000e+01 : f32
    %70 = vector.broadcast %cst_31 : f32 to vector<8x1xf32>
    %71 = arith.divf %69, %70 : vector<8x1xf32>
    %72 = vector.broadcast %64 : vector<8x1xf32> to vector<8x32xf32>
    %73 = arith.subf %58, %72 : vector<8x32xf32>
    %cst_32 = arith.constant 9.99999996E-13 : f32
    %74 = vector.broadcast %cst_32 : f32 to vector<8x1xf32>
    %75 = arith.addf %71, %74 : vector<8x1xf32>
    %76 = math.rsqrt %75 : vector<8x1xf32>
    %77 = vector.broadcast %76 : vector<8x1xf32> to vector<8x32xf32>
    %78 = arith.mulf %73, %77 : vector<8x32xf32>
    %79 = vector.broadcast %59 : vector<1x32xf32> to vector<8x32xf32>
    %80 = arith.mulf %78, %79 : vector<8x32xf32>
    %81 = vector.broadcast %60 : vector<1x32xf32> to vector<8x32xf32>
    %82 = arith.addf %80, %81 : vector<8x32xf32>
    %83 = arith.truncf %82 : vector<8x32xf32> to vector<8x32xbf16>
    %cst_33 = arith.constant 0.000000e+00 : f32
    %84 = vector.broadcast %cst_33 : f32 to vector<8x32xf32>
    %c0_34 = arith.constant 0 : index
    %c0_35 = arith.constant 0 : index
    %85 = vector.load %arg7[%c0_34, %c0_35] : memref<32x128xbf16, #tpu.memory_space<vmem>>, vector<32x128xbf16>
    %cst_36 = arith.constant dense<0.000000e+00> : vector<8x128xf32>
    %86 = tpu.matmul %83, %85, %cst_36 {dimension_numbers = #tpu.dot_dimension_numbers<[1], [0], [0], [1], [0, 0, 1, 1], [], []>} : vector<8x32xbf16>, vector<32x128xbf16>, vector<8x128xf32> -> vector<8x128xf32>
    %87 = vector.broadcast %5 : vector<1x128xf32> to vector<8x128xf32>
    %88 = arith.addf %86, %87 : vector<8x128xf32>
    %cst_37 = arith.constant 5.000000e-01 : f32
    %89 = vector.broadcast %cst_37 : f32 to vector<8x128xf32>
    %90 = arith.mulf %89, %88 : vector<8x128xf32>
    %cst_38 = arith.constant 4.471500e-02 : f32
    %91 = vector.broadcast %cst_38 : f32 to vector<8x128xf32>
    %92 = arith.mulf %91, %88 : vector<8x128xf32>
    %93 = arith.mulf %92, %88 : vector<8x128xf32>
    %94 = arith.mulf %93, %88 : vector<8x128xf32>
    %95 = arith.addf %88, %94 : vector<8x128xf32>
    %cst_39 = arith.constant 0.797884583 : f32
    %96 = vector.broadcast %cst_39 : f32 to vector<8x128xf32>
    %97 = arith.mulf %96, %95 : vector<8x128xf32>
    %98 = math.tanh %97 : vector<8x128xf32>
    %cst_40 = arith.constant 1.000000e+00 : f32
    %99 = vector.broadcast %cst_40 : f32 to vector<8x128xf32>
    %100 = arith.addf %99, %98 : vector<8x128xf32>
    %101 = arith.mulf %90, %100 : vector<8x128xf32>
    %102 = arith.truncf %101 : vector<8x128xf32> to vector<8x128xbf16>
    %c0_41 = arith.constant 0 : index
    %c0_42 = arith.constant 0 : index
    %103 = vector.load %arg8[%c0_41, %c0_42] : memref<128x32xbf16, #tpu.memory_space<vmem>>, vector<128x32xbf16>
    %cst_43 = arith.constant dense<0.000000e+00> : vector<8x32xf32>
    %104 = tpu.matmul %102, %103, %cst_43 {dimension_numbers = #tpu.dot_dimension_numbers<[1], [0], [0], [1], [0, 0, 1, 1], [], []>} : vector<8x128xbf16>, vector<128x32xbf16>, vector<8x32xf32> -> vector<8x32xf32>
    %105 = arith.addf %84, %104 : vector<8x32xf32>
    %106 = vector.extract_strided_slice %4 {offsets = [6, 0], sizes = [1, 32], strides = [1, 1]} : vector<9x32xf32> to vector<1x32xf32>
    %107 = vector.broadcast %106 : vector<1x32xf32> to vector<8x32xf32>
    %108 = arith.addf %105, %107 : vector<8x32xf32>
    %109 = arith.addf %82, %108 : vector<8x32xf32>
    %110 = vector.extract_strided_slice %4 {offsets = [7, 0], sizes = [1, 32], strides = [1, 1]} : vector<9x32xf32> to vector<1x32xf32>
    %111 = vector.extract_strided_slice %4 {offsets = [8, 0], sizes = [1, 32], strides = [1, 1]} : vector<9x32xf32> to vector<1x32xf32>
    %cst_44 = arith.constant dense<0.000000e+00> : vector<8xf32>
    %112 = vector.multi_reduction <add>, %109, %cst_44 [1] : vector<8x32xf32> to vector<8xf32>
    %113 = vector.shape_cast %112 : vector<8xf32> to vector<8x1xf32>
    %cst_45 = arith.constant 3.200000e+01 : f32
    %114 = vector.broadcast %cst_45 : f32 to vector<8x1xf32>
    %115 = arith.divf %113, %114 : vector<8x1xf32>
    %116 = vector.broadcast %115 : vector<8x1xf32> to vector<8x32xf32>
    %117 = arith.subf %109, %116 : vector<8x32xf32>
    %118 = arith.mulf %117, %117 : vector<8x32xf32>
    %cst_46 = arith.constant dense<0.000000e+00> : vector<8xf32>
    %119 = vector.multi_reduction <add>, %118, %cst_46 [1] : vector<8x32xf32> to vector<8xf32>
    %120 = vector.shape_cast %119 : vector<8xf32> to vector<8x1xf32>
    %cst_47 = arith.constant 3.200000e+01 : f32
    %121 = vector.broadcast %cst_47 : f32 to vector<8x1xf32>
    %122 = arith.divf %120, %121 : vector<8x1xf32>
    %123 = vector.broadcast %115 : vector<8x1xf32> to vector<8x32xf32>
    %124 = arith.subf %109, %123 : vector<8x32xf32>
    %cst_48 = arith.constant 9.99999996E-13 : f32
    %125 = vector.broadcast %cst_48 : f32 to vector<8x1xf32>
    %126 = arith.addf %122, %125 : vector<8x1xf32>
    %127 = math.rsqrt %126 : vector<8x1xf32>
    %128 = vector.broadcast %127 : vector<8x1xf32> to vector<8x32xf32>
    %129 = arith.mulf %124, %128 : vector<8x32xf32>
    %130 = vector.broadcast %110 : vector<1x32xf32> to vector<8x32xf32>
    %131 = arith.mulf %129, %130 : vector<8x32xf32>
    %132 = vector.broadcast %111 : vector<1x32xf32> to vector<8x32xf32>
    %133 = arith.addf %131, %132 : vector<8x32xf32>
    %134 = vector.shape_cast %133 : vector<8x32xf32> to vector<1x8x32xf32>
    %135 = tpu.iota {dimensions = array<i32: 2>} : vector<1x1x8xi32>
    %136 = vector.broadcast %2 : vector<1x1x1xi32> to vector<1x1x8xi32>
    %137 = arith.cmpi slt, %135, %136 : vector<1x1x8xi32>
    %138 = arith.extui %137 : vector<1x1x8xi1> to vector<1x1x8xi32>
    %139 = arith.sitofp %138 : vector<1x1x8xi32> to vector<1x1x8xf32>
    %cst_49 = arith.constant 1.000000e+00 : f32
    %140 = vector.broadcast %cst_49 : f32 to vector<1x1x8xf32>
    %141 = arith.subf %140, %139 : vector<1x1x8xf32>
    %142 = arith.sitofp %2 : vector<1x1x1xi32> to vector<1x1x1xf32>
    %cst_50 = arith.constant 1.000000e+00 : f32
    %143 = vector.broadcast %cst_50 : f32 to vector<1x1x1xf32>
    %144 = arith.maximumf %142, %143 : vector<1x1x1xf32>
    %145 = arith.sitofp %2 : vector<1x1x1xi32> to vector<1x1x1xf32>
    %cst_51 = arith.constant 8.000000e+00 : f32
    %146 = vector.broadcast %cst_51 : f32 to vector<1x1x1xf32>
    %147 = arith.subf %146, %145 : vector<1x1x1xf32>
    %cst_52 = arith.constant 1.000000e+00 : f32
    %148 = vector.broadcast %cst_52 : f32 to vector<1x1x1xf32>
    %149 = arith.maximumf %147, %148 : vector<1x1x1xf32>
    "tpu.trace_start"() <{level = 10 : i32, message = "bqs,bsh->bqh"}> : () -> ()
    %cst_53 = arith.constant dense<0.000000e+00> : vector<1x1x32xf32>
    %150 = tpu.matmul %139, %134, %cst_53 {dimension_numbers = #tpu.dot_dimension_numbers<[2], [1], [1], [2], [0, 0, 0, 1, 1, 2], [0], [0]>} : vector<1x1x8xf32>, vector<1x8x32xf32>, vector<1x1x32xf32> -> vector<1x1x32xf32>
    "tpu.trace_stop"() : () -> ()
    %151 = tpu.reciprocal %144 {approx = true} : vector<1x1x1xf32> -> vector<1x1x1xf32>
    %152 = vector.broadcast %151 : vector<1x1x1xf32> to vector<1x1x32xf32>
    %153 = arith.mulf %150, %152 : vector<1x1x32xf32>
    "tpu.trace_start"() <{level = 10 : i32, message = "bqs,bsh->bqh"}> : () -> ()
    %cst_54 = arith.constant dense<0.000000e+00> : vector<1x1x32xf32>
    %154 = tpu.matmul %141, %134, %cst_54 {dimension_numbers = #tpu.dot_dimension_numbers<[2], [1], [1], [2], [0, 0, 0, 1, 1, 2], [0], [0]>} : vector<1x1x8xf32>, vector<1x8x32xf32>, vector<1x1x32xf32> -> vector<1x1x32xf32>
    "tpu.trace_stop"() : () -> ()
    %155 = tpu.reciprocal %149 {approx = true} : vector<1x1x1xf32> -> vector<1x1x1xf32>
    %156 = vector.broadcast %155 : vector<1x1x1xf32> to vector<1x1x32xf32>
    %157 = arith.mulf %154, %156 : vector<1x1x32xf32>
    %158 = arith.subf %153, %157 : vector<1x1x32xf32>
    %cst_55 = arith.constant 9.99999997E-7 : f32
    %159 = vector.broadcast %cst_55 : f32 to vector<1x1x32xf32>
    %160 = arith.addf %158, %159 : vector<1x1x32xf32>
    %161 = arith.mulf %160, %160 : vector<1x1x32xf32>
    %cst_56 = arith.constant dense<0.000000e+00> : vector<1x1xf32>
    %162 = vector.multi_reduction <add>, %161, %cst_56 [2] : vector<1x1x32xf32> to vector<1x1xf32>
    %163 = vector.shape_cast %162 : vector<1x1xf32> to vector<1x1x1xf32>
    %164 = math.sqrt %163 : vector<1x1x1xf32>
    %cst_57 = arith.constant 1.000000e+00 : f32
    %165 = vector.broadcast %cst_57 : f32 to vector<1x1x1xf32>
    %166 = arith.subf %165, %164 : vector<1x1x1xf32>
    %cst_58 = arith.constant 0.000000e+00 : f32
    %167 = vector.broadcast %cst_58 : f32 to vector<1x1x1xf32>
    %168 = arith.maximumf %166, %167 : vector<1x1x1xf32>
    %169 = arith.mulf %3, %163 : vector<1x1x1xf32>
    %cst_59 = arith.constant 1.000000e+00 : f32
    %170 = vector.broadcast %cst_59 : f32 to vector<1x1x1xf32>
    %171 = arith.subf %170, %3 : vector<1x1x1xf32>
    %172 = arith.mulf %171, %168 : vector<1x1x1xf32>
    %173 = arith.mulf %172, %168 : vector<1x1x1xf32>
    %174 = arith.addf %169, %173 : vector<1x1x1xf32>
    %c0_60 = arith.constant 0 : index
    %c0_61 = arith.constant 0 : index
    %c0_62 = arith.constant 0 : index
    %175 = vector.load %arg11[%c0_60, %c0_61, %c0_62] : memref<1x1x32xf32, #tpu.memory_space<vmem>>, vector<1x1x32xf32>
    tpu.vector_store %arg11[%c0_60, %c0_61, %c0_62], %153 {strides = array<i32>} : memref<1x1x32xf32, #tpu.memory_space<vmem>>, vector<1x1x32xf32>,
    %c0_63 = arith.constant 0 : index
    %c0_64 = arith.constant 0 : index
    %c0_65 = arith.constant 0 : index
    %176 = vector.load %arg12[%c0_63, %c0_64, %c0_65] : memref<1x1x32xf32, #tpu.memory_space<vmem>>, vector<1x1x32xf32>
    tpu.vector_store %arg12[%c0_63, %c0_64, %c0_65], %157 {strides = array<i32>} : memref<1x1x32xf32, #tpu.memory_space<vmem>>, vector<1x1x32xf32>,
    %c0_66 = arith.constant 0 : index
    %c0_67 = arith.constant 0 : index
    %c0_68 = arith.constant 0 : index
    %177 = vector.load %arg13[%c0_66, %c0_67, %c0_68] : memref<1x1x1xf32, #tpu.memory_space<vmem>>, vector<1x1x1xf32>
    tpu.vector_store %arg13[%c0_66, %c0_67, %c0_68], %174 {strides = array<i32>} : memref<1x1x1xf32, #tpu.memory_space<vmem>>, vector<1x1x1xf32>,
    return
  }
  func.func @transform_0(%arg0: i32) -> (i32, i32, i32) {
    %c0_i32 = arith.constant 0 : i32
    %c0_i32_0 = arith.constant 0 : i32
    %c0_i32_1 = arith.constant 0 : i32
    return %arg0, %c0_i32, %c0_i32_0 : i32, i32, i32
  }
  func.func @transform_1(%arg0: i32) -> (i32, i32, i32) {
    %c0_i32 = arith.constant 0 : i32
    %c0_i32_0 = arith.constant 0 : i32
    %c0_i32_1 = arith.constant 0 : i32
    return %arg0, %c0_i32, %c0_i32_0 : i32, i32, i32
  }
  func.func @transform_2(%arg0: i32) -> (i32, i32, i32) {
    %c0_i32 = arith.constant 0 : i32
    %c0_i32_0 = arith.constant 0 : i32
    %c0_i32_1 = arith.constant 0 : i32
    return %arg0, %c0_i32, %c0_i32_0 : i32, i32, i32
  }
  func.func @transform_3(%arg0: i32) -> (i32, i32, i32) {
    %c0_i32 = arith.constant 0 : i32
    %c0_i32_0 = arith.constant 0 : i32
    %c0_i32_1 = arith.constant 0 : i32
    return %arg0, %c0_i32, %c0_i32_0 : i32, i32, i32
  }
  func.func @transform_4(%arg0: i32) -> (i32, i32) {
    %c0_i32 = arith.constant 0 : i32
    %c0_i32_0 = arith.constant 0 : i32
    %c0_i32_1 = arith.constant 0 : i32
    return %c0_i32, %c0_i32_0 : i32, i32
  }
  func.func @transform_5(%arg0: i32) -> (i32, i32) {
    %c0_i32 = arith.constant 0 : i32
    %c0_i32_0 = arith.constant 0 : i32
    %c0_i32_1 = arith.constant 0 : i32
    return %c0_i32, %c0_i32_0 : i32, i32
  }
  func.func @transform_6(%arg0: i32) -> (i32, i32) {
    %c0_i32 = arith.constant 0 : i32
    %c0_i32_0 = arith.constant 0 : i32
    %c0_i32_1 = arith.constant 0 : i32
    return %c0_i32, %c0_i32_0 : i32, i32
  }
  func.func @transform_7(%arg0: i32) -> (i32, i32) {
    %c0_i32 = arith.constant 0 : i32
    %c0_i32_0 = arith.constant 0 : i32
    %c0_i32_1 = arith.constant 0 : i32
    return %c0_i32, %c0_i32_0 : i32, i32
  }
  func.func @transform_8(%arg0: i32) -> (i32, i32) {
    %c0_i32 = arith.constant 0 : i32
    %c0_i32_0 = arith.constant 0 : i32
    %c0_i32_1 = arith.constant 0 : i32
    return %c0_i32, %c0_i32_0 : i32, i32
  }
  func.func @transform_9(%arg0: i32) -> (i32, i32) {
    %c0_i32 = arith.constant 0 : i32
    %c0_i32_0 = arith.constant 0 : i32
    %c0_i32_1 = arith.constant 0 : i32
    return %c0_i32, %c0_i32_0 : i32, i32
  }
  func.func @transform_10(%arg0: i32) -> (i32, i32, i32) {
    %c0_i32 = arith.constant 0 : i32
    %c0_i32_0 = arith.constant 0 : i32
    %c0_i32_1 = arith.constant 0 : i32
    return %arg0, %c0_i32, %c0_i32_0 : i32, i32, i32
  }
  func.func @transform_11(%arg0: i32) -> (i32, i32, i32) {
    %c0_i32 = arith.constant 0 : i32
    %c0_i32_0 = arith.constant 0 : i32
    %c0_i32_1 = arith.constant 0 : i32
    return %arg0, %c0_i32, %c0_i32_0 : i32, i32, i32
  }
  func.func @transform_12(%arg0: i32) -> (i32, i32, i32) {
    %c0_i32 = arith.constant 0 : i32
    %c0_i32_0 = arith.constant 0 : i32
    %c0_i32_1 = arith.constant 0 : i32
    return %arg0, %c0_i32, %c0_i32_0 : i32, i32, i32
  }
}

</mosaic_0001>

<llo_original>
// kernel: bert_contrastive_forward.1
$region0: #{bert_contrastive_forward.1}
  #allocation0 [shape = 'u32[]', space=smem, size = 0x4, offset = 0x4, fixed_abs, tag = 'smem constant byte address 0x4 - core index']
  #allocation1 [shape = 'u32[72,128]{1,0:T(1,128)}', space=vmem, size = 0x9000, scoped, tag = 'internal scratch']
  %s0 = inlined_call_operand.vmem [shape: f32[2,8,32], index: 0, kind: input, shape index: {}]
  %s1 = inlined_call_operand.vmem [shape: f32[2,1,8], index: 1, kind: input, shape index: {}]
  %s2 = inlined_call_operand.vmem [shape: s32[2,1,1], index: 2, kind: input, shape index: {}]
  %s3 = inlined_call_operand.vmem [shape: f32[2,1,1], index: 3, kind: input, shape index: {}]
  %s4 = inlined_call_operand.vmem [shape: bf16[32,96], index: 4, kind: input, shape index: {}]
  %s5 = inlined_call_operand.vmem [shape: bf16[32,32], index: 5, kind: input, shape index: {}]
  %s6 = inlined_call_operand.vmem [shape: bf16[32,128], index: 6, kind: input, shape index: {}]
  %s7 = inlined_call_operand.vmem [shape: bf16[128,32], index: 7, kind: input, shape index: {}]
  %s8 = inlined_call_operand.vmem [shape: f32[9,32], index: 8, kind: input, shape index: {}]
  %s9 = inlined_call_operand.vmem [shape: f32[1,128], index: 9, kind: input, shape index: {}]
  %s10 = inlined_call_operand.hbm [shape: f32[2,1,32], index: 10, kind: output, shape index: {0}]
  %s11 = inlined_call_operand.hbm [shape: f32[2,1,32], index: 11, kind: output, shape index: {1}]
  %s12 = inlined_call_operand.vmem [shape: f32[2,1,1], index: 12, kind: output, shape index: {2}]
  %13 = xla_tuple %s10, %s11, %s12
  %s14 = sld [smem:[#allocation0]]
  $region89: #{bert_contrastive_forward.1} parent=0
    _
  %s16 = ssub.s32 1, %s14
  %s17 = scalar_select 0, %s16, %s14
  $region1: #{bert_contrastive_forward.1} parent=0
    #allocation2 [shape = 'u8[1024]{0}', space=vmem, size = 0x400, scoped, tag = 'output window, operand 0']
    #allocation3 [shape = 's32[2]{0}', space=sflag, size = 0x8, scoped, tag = 'scoped memory for bert_contrastive_forward.1']
    #allocation4 [shape = 'u8[1024]{0}', space=vmem, size = 0x400, scoped, tag = 'output window, operand 1']
    #allocation5 [shape = 's32[2]{0}', space=sflag, size = 0x8, scoped, tag = 'scoped memory for bert_contrastive_forward.1']
    %18 = vsyncpa [#allocation3], 0
    %s19 = scalar_lea.sflag [#allocation3], 1
    %20 = vsyncpa %s19, 0
    %21 = vsyncpa [#allocation5], 0
    %s22 = scalar_lea.sflag [#allocation5], 1
    %23 = vsyncpa %s22, 0
    loop: start=0, step=1, limit=4
    $region2: #{bert_contrastive_forward.1} parent=1 // loop_pre_header
      _
    $region3: #{bert_contrastive_forward.1} parent=1 // loop_header
      %s25 = sphi 0, %s29
      %p26 = scmp.ge.s32.totalorder %s25, 4
      %s35 = sphi 0, %s37
      %s38 = sphi 0, %s35
      %s39 = sphi 0, %s38
      %s55 = sphi 0, %s39
      %s61 = sphi 0, %s63
      %s64 = sphi 0, %s61
      %s65 = sphi 0, %s64
      %s81 = sphi 0, %s65
      %s87 = sphi 0, %s89
      %s90 = sphi 0, %s87
      %s91 = sphi 0, %s90
      %s107 = sphi 0, %s91
      %s113 = sphi 0, %s115
      %s116 = sphi 0, %s113
      %s117 = sphi 0, %s116
      %s133 = sphi 0, %s117
      %s137 = sphi 0, %s137
      %s139 = sphi 0, %s137
      %s140 = sphi 0, %s139
      %s154 = sphi 0, %s140
      %s158 = sphi 0, %s158
      %s160 = sphi 0, %s158
      %s161 = sphi 0, %s160
      %s175 = sphi 0, %s161
      %s179 = sphi 0, %s179
      %s181 = sphi 0, %s179
      %s182 = sphi 0, %s181
      %s196 = sphi 0, %s182
      %s200 = sphi 0, %s200
      %s202 = sphi 0, %s200
      %s203 = sphi 0, %s202
      %s217 = sphi 0, %s203
      %s221 = sphi 0, %s221
      %s223 = sphi 0, %s221
      %s224 = sphi 0, %s223
      %s238 = sphi 0, %s224
      %s242 = sphi 0, %s242
      %s244 = sphi 0, %s242
      %s245 = sphi 0, %s244
      %s259 = sphi 0, %s245
      %s265 = sphi 0, %s267
      %s268 = sphi 0, %s265
      %s269 = sphi 0, %s268
      %s285 = sphi 0, %s269
      %s291 = sphi 0, %s293
      %s294 = sphi 0, %s291
      %s295 = sphi 0, %s294
      %s311 = sphi 0, %s295
      %s317 = sphi 0, %s319
      %s320 = sphi 0, %s317
      %s321 = sphi 0, %s320
      %s337 = sphi 0, %s321
    $region4: #{bert_contrastive_forward.1} parent=1 // loop_header_branch
      %28 = sbr.rel (%p26) target = $region8
    $region5: #{bert_contrastive_forward.1} parent=1 // loop_body
      %s30 = ssub.s32 %s25, 1
      %s31 = ssub.s32 %s25, 2
      %s32 = sadd.s32 %s25, 1
      %s33 = ssub.s32 %s25, %s32
      %p34 = scmp.eq.s32.totalorder %s33, 0
      %s36 = sadd.s32 %s35, 1
      %s37 = scalar_select %p34, %s35, %s36
      %p40 = pneg %p34
      %p41 = scmp.eq.s32.totalorder %s25, 1
      %p42 = por %p40, %p41
      %p43 = scmp.ne.s32.totalorder %s35, %s38
      %p44 = scmp.eq.s32.totalorder %s25, 0
      %p45 = por %p43, %p44
      %p46 = scmp.ne.s32.totalorder %s35, %s38
      %p47 = scmp.eq.s32.totalorder %s30, 1
      %p48 = por %p46, %p47
      %p49 = scmp.ne.s32.totalorder %s38, %s39
      %p50 = scmp.eq.s32.totalorder %s30, 0
      %p51 = por %p49, %p50
      %p52 = scmp.ne.s32.totalorder %s38, %s39
      %p53 = scmp.eq.s32.totalorder %s31, 1
      %p54 = por %p52, %p53
      %p56 = scmp.ne.s32.totalorder %s39, %s55
      %p57 = scmp.eq.s32.totalorder %s31, 0
      %p58 = por %p56, %p57
      %s59 = ssub.s32 %s25, %s32
      %p60 = scmp.eq.s32.totalorder %s59, 0
      %s62 = sadd.s32 %s61, 1
      %s63 = scalar_select %p60, %s61, %s62
      %p66 = pneg %p60
      %p67 = scmp.eq.s32.totalorder %s25, 1
      %p68 = por %p66, %p67
      %p69 = scmp.ne.s32.totalorder %s61, %s64
      %p70 = scmp.eq.s32.totalorder %s25, 0
      %p71 = por %p69, %p70
      %p72 = scmp.ne.s32.totalorder %s61, %s64
      %p73 = scmp.eq.s32.totalorder %s30, 1
      %p74 = por %p72, %p73
      %p75 = scmp.ne.s32.totalorder %s64, %s65
      %p76 = scmp.eq.s32.totalorder %s30, 0
      %p77 = por %p75, %p76
      %p78 = scmp.ne.s32.totalorder %s64, %s65
      %p79 = scmp.eq.s32.totalorder %s31, 1
      %p80 = por %p78, %p79
      %p82 = scmp.ne.s32.totalorder %s65, %s81
      %p83 = scmp.eq.s32.totalorder %s31, 0
      %p84 = por %p82, %p83
      %s85 = ssub.s32 %s25, %s32
      %p86 = scmp.eq.s32.totalorder %s85, 0
      %s88 = sadd.s32 %s87, 1
      %s89 = scalar_select %p86, %s87, %s88
      %p92 = pneg %p86
      %p93 = scmp.eq.s32.totalorder %s25, 1
      %p94 = por %p92, %p93
      %p95 = scmp.ne.s32.totalorder %s87, %s90
      %p96 = scmp.eq.s32.totalorder %s25, 0
      %p97 = por %p95, %p96
      %p98 = scmp.ne.s32.totalorder %s87, %s90
      %p99 = scmp.eq.s32.totalorder %s30, 1
      %p100 = por %p98, %p99
      %p101 = scmp.ne.s32.totalorder %s90, %s91
      %p102 = scmp.eq.s32.totalorder %s30, 0
      %p103 = por %p101, %p102
      %p104 = scmp.ne.s32.totalorder %s90, %s91
      %p105 = scmp.eq.s32.totalorder %s31, 1
      %p106 = por %p104, %p105
      %p108 = scmp.ne.s32.totalorder %s91, %s107
      %p109 = scmp.eq.s32.totalorder %s31, 0
      %p110 = por %p108, %p109
      %s111 = ssub.s32 %s25, %s32
      %p112 = scmp.eq.s32.totalorder %s111, 0
      %s114 = sadd.s32 %s113, 1
      %s115 = scalar_select %p112, %s113, %s114
      %p118 = pneg %p112
      %p119 = scmp.eq.s32.totalorder %s25, 1
      %p120 = por %p118, %p119
      %p121 = scmp.ne.s32.totalorder %s113, %s116
      %p122 = scmp.eq.s32.totalorder %s25, 0
      %p123 = por %p121, %p122
      %p124 = scmp.ne.s32.totalorder %s113, %s116
      %p125 = scmp.eq.s32.totalorder %s30, 1
      %p126 = por %p124, %p125
      %p127 = scmp.ne.s32.totalorder %s116, %s117
      %p128 = scmp.eq.s32.totalorder %s30, 0
      %p129 = por %p127, %p128
      %p130 = scmp.ne.s32.totalorder %s116, %s117
      %p131 = scmp.eq.s32.totalorder %s31, 1
      %p132 = por %p130, %p131
      %p134 = scmp.ne.s32.totalorder %s117, %s133
      %p135 = scmp.eq.s32.totalorder %s31, 0
      %p136 = por %p134, %p135
      %s138 = sadd.s32 %s137, 1
      %p141 = scmp.eq.s32.totalorder %s25, 1
      %p142 = scmp.ne.s32.totalorder %s137, %s139
      %p143 = scmp.eq.s32.totalorder %s25, 0
      %p144 = por %p142, %p143
      %p145 = scmp.ne.s32.totalorder %s137, %s139
      %p146 = scmp.eq.s32.totalorder %s30, 1
      %p147 = por %p145, %p146
      %p148 = scmp.ne.s32.totalorder %s139, %s140
      %p149 = scmp.eq.s32.totalorder %s30, 0
      %p150 = por %p148, %p149
      %p151 = scmp.ne.s32.totalorder %s139, %s140
      %p152 = scmp.eq.s32.totalorder %s31, 1
      %p153 = por %p151, %p152
      %p155 = scmp.ne.s32.totalorder %s140, %s154
      %p156 = scmp.eq.s32.totalorder %s31, 0
      %p157 = por %p155, %p156
      %s159 = sadd.s32 %s158, 1
      %p162 = scmp.eq.s32.totalorder %s25, 1
      %p163 = scmp.ne.s32.totalorder %s158, %s160
      %p164 = scmp.eq.s32.totalorder %s25, 0
      %p165 = por %p163, %p164
      %p166 = scmp.ne.s32.totalorder %s158, %s160
      %p167 = scmp.eq.s32.totalorder %s30, 1
      %p168 = por %p166, %p167
      %p169 = scmp.ne.s32.totalorder %s160, %s161
      %p170 = scmp.eq.s32.totalorder %s30, 0
      %p171 = por %p169, %p170
      %p172 = scmp.ne.s32.totalorder %s160, %s161
      %p173 = scmp.eq.s32.totalorder %s31, 1
      %p174 = por %p172, %p173
      %p176 = scmp.ne.s32.totalorder %s161, %s175
      %p177 = scmp.eq.s32.totalorder %s31, 0
      %p178 = por %p176, %p177
      %s180 = sadd.s32 %s179, 1
      %p183 = scmp.eq.s32.totalorder %s25, 1
      %p184 = scmp.ne.s32.totalorder %s179, %s181
      %p185 = scmp.eq.s32.totalorder %s25, 0
      %p186 = por %p184, %p185
      %p187 = scmp.ne.s32.totalorder %s179, %s181
      %p188 = scmp.eq.s32.totalorder %s30, 1
      %p189 = por %p187, %p188
      %p190 = scmp.ne.s32.totalorder %s181, %s182
      %p191 = scmp.eq.s32.totalorder %s30, 0
      %p192 = por %p190, %p191
      %p193 = scmp.ne.s32.totalorder %s181, %s182
      %p194 = scmp.eq.s32.totalorder %s31, 1
      %p195 = por %p193, %p194
      %p197 = scmp.ne.s32.totalorder %s182, %s196
      %p198 = scmp.eq.s32.totalorder %s31, 0
      %p199 = por %p197, %p198
      %s201 = sadd.s32 %s200, 1
      %p204 = scmp.eq.s32.totalorder %s25, 1
      %p205 = scmp.ne.s32.totalorder %s200, %s202
      %p206 = scmp.eq.s32.totalorder %s25, 0
      %p207 = por %p205, %p206
      %p208 = scmp.ne.s32.totalorder %s200, %s202
      %p209 = scmp.eq.s32.totalorder %s30, 1
      %p210 = por %p208, %p209
      %p211 = scmp.ne.s32.totalorder %s202, %s203
      %p212 = scmp.eq.s32.totalorder %s30, 0
      %p213 = por %p211, %p212
      %p214 = scmp.ne.s32.totalorder %s202, %s203
      %p215 = scmp.eq.s32.totalorder %s31, 1
      %p216 = por %p214, %p215
      %p218 = scmp.ne.s32.totalorder %s203, %s217
      %p219 = scmp.eq.s32.totalorder %s31, 0
      %p220 = por %p218, %p219
      %s222 = sadd.s32 %s221, 1
      %p225 = scmp.eq.s32.totalorder %s25, 1
      %p226 = scmp.ne.s32.totalorder %s221, %s223
      %p227 = scmp.eq.s32.totalorder %s25, 0
      %p228 = por %p226, %p227
      %p229 = scmp.ne.s32.totalorder %s221, %s223
      %p230 = scmp.eq.s32.totalorder %s30, 1
      %p231 = por %p229, %p230
      %p232 = scmp.ne.s32.totalorder %s223, %s224
      %p233 = scmp.eq.s32.totalorder %s30, 0
      %p234 = por %p232, %p233
      %p235 = scmp.ne.s32.totalorder %s223, %s224
      %p236 = scmp.eq.s32.totalorder %s31, 1
      %p237 = por %p235, %p236
      %p239 = scmp.ne.s32.totalorder %s224, %s238
      %p240 = scmp.eq.s32.totalorder %s31, 0
      %p241 = por %p239, %p240
      %s243 = sadd.s32 %s242, 1
      %p246 = scmp.eq.s32.totalorder %s25, 1
      %p247 = scmp.ne.s32.totalorder %s242, %s244
      %p248 = scmp.eq.s32.totalorder %s25, 0
      %p249 = por %p247, %p248
      %p250 = scmp.ne.s32.totalorder %s242, %s244
      %p251 = scmp.eq.s32.totalorder %s30, 1
      %p252 = por %p250, %p251
      %p253 = scmp.ne.s32.totalorder %s244, %s245
      %p254 = scmp.eq.s32.totalorder %s30, 0
      %p255 = por %p253, %p254
      %p256 = scmp.ne.s32.totalorder %s244, %s245
      %p257 = scmp.eq.s32.totalorder %s31, 1
      %p258 = por %p256, %p257
      %p260 = scmp.ne.s32.totalorder %s245, %s259
      %p261 = scmp.eq.s32.totalorder %s31, 0
      %p262 = por %p260, %p261
      %s263 = ssub.s32 %s25, %s32
      %p264 = scmp.eq.s32.totalorder %s263, 0
      %s266 = sadd.s32 %s265, 1
      %s267 = scalar_select %p264, %s265, %s266
      %p270 = pneg %p264
      %p271 = scmp.eq.s32.totalorder %s25, 1
      %p272 = por %p270, %p271
      %p273 = scmp.ne.s32.totalorder %s265, %s268
      %p274 = scmp.eq.s32.totalorder %s25, 0
      %p275 = por %p273, %p274
      %p276 = scmp.ne.s32.totalorder %s265, %s268
      %p277 = scmp.eq.s32.totalorder %s30, 1
      %p278 = por %p276, %p277
      %p279 = scmp.ne.s32.totalorder %s268, %s269
      %p280 = scmp.eq.s32.totalorder %s30, 0
      %p281 = por %p279, %p280
      %p282 = scmp.ne.s32.totalorder %s268, %s269
      %p283 = scmp.eq.s32.totalorder %s31, 1
      %p284 = por %p282, %p283
      %p286 = scmp.ne.s32.totalorder %s269, %s285
      %p287 = scmp.eq.s32.totalorder %s31, 0
      %p288 = por %p286, %p287
      %s289 = ssub.s32 %s25, %s32
      %p290 = scmp.eq.s32.totalorder %s289, 0
      %s292 = sadd.s32 %s291, 1
      %s293 = scalar_select %p290, %s291, %s292
      %p296 = pneg %p290
      %p297 = scmp.eq.s32.totalorder %s25, 1
      %p298 = por %p296, %p297
      %p299 = scmp.ne.s32.totalorder %s291, %s294
      %p300 = scmp.eq.s32.totalorder %s25, 0
      %p301 = por %p299, %p300
      %p302 = scmp.ne.s32.totalorder %s291, %s294
      %p303 = scmp.eq.s32.totalorder %s30, 1
      %p304 = por %p302, %p303
      %p305 = scmp.ne.s32.totalorder %s294, %s295
      %p306 = scmp.eq.s32.totalorder %s30, 0
      %p307 = por %p305, %p306
      %p308 = scmp.ne.s32.totalorder %s294, %s295
      %p309 = scmp.eq.s32.totalorder %s31, 1
      %p310 = por %p308, %p309
      %p312 = scmp.ne.s32.totalorder %s295, %s311
      %p313 = scmp.eq.s32.totalorder %s31, 0
      %p314 = por %p312, %p313
      %s315 = ssub.s32 %s25, %s32
      %p316 = scmp.eq.s32.totalorder %s315, 0
      %s318 = sadd.s32 %s317, 1
      %s319 = scalar_select %p316, %s317, %s318
      %p322 = pneg %p316
      %p323 = scmp.eq.s32.totalorder %s25, 1
      %p324 = por %p322, %p323
      %p325 = scmp.ne.s32.totalorder %s317, %s320
      %p326 = scmp.eq.s32.totalorder %s25, 0
      %p327 = por %p325, %p326
      %p328 = scmp.ne.s32.totalorder %s317, %s320
      %p329 = scmp.eq.s32.totalorder %s30, 1
      %p330 = por %p328, %p329
      %p331 = scmp.ne.s32.totalorder %s320, %s321
      %p332 = scmp.eq.s32.totalorder %s30, 0
      %p333 = por %p331, %p332
      %p334 = scmp.ne.s32.totalorder %s320, %s321
      %p335 = scmp.eq.s32.totalorder %s31, 1
      %p336 = por %p334, %p335
      %p338 = scmp.ne.s32.totalorder %s321, %s337
      %p339 = scmp.eq.s32.totalorder %s31, 0
      %p340 = por %p338, %p339
      %p341 = scmp.le.s32.totalorder 1, %s25
      %p342 = scmp.lt.s32.totalorder %s25, 3
      %p343 = pnand %p341, %p342
      %p344 = pneg %p343
      // Predicated region
      $region9: #{bert_contrastive_forward.1} parent=5 // pred_check
        _
      $region10: #{bert_contrastive_forward.1} parent=5 // pred_check_branch
        %346 = sbr.rel (%p343) target = $region12
      $region11: #{bert_contrastive_forward.1} parent=5 // pred_region
        %s347 = ssub.s32 %s25, 1
        // Predicated region
        $region13: #{bert_contrastive_forward.1} parent=11 // pred_check
          %p348 = pneg %p150
        $region14: #{bert_contrastive_forward.1} parent=11 // pred_check_branch
          %350 = sbr.rel (%p348) target = $region16
        $region15: #{bert_contrastive_forward.1} parent=11 // pred_region
          _
        $region16: #{bert_contrastive_forward.1} parent=11 // pred_fallthru
          _
        // Predicated region
        $region17: #{bert_contrastive_forward.1} parent=11 // pred_check
          %p351 = pneg %p171
        $region18: #{bert_contrastive_forward.1} parent=11 // pred_check_branch
          %353 = sbr.rel (%p351) target = $region20
        $region19: #{bert_contrastive_forward.1} parent=11 // pred_region
          _
        $region20: #{bert_contrastive_forward.1} parent=11 // pred_fallthru
          _
        // Predicated region
        $region21: #{bert_contrastive_forward.1} parent=11 // pred_check
          %p354 = pneg %p192
        $region22: #{bert_contrastive_forward.1} parent=11 // pred_check_branch
          %356 = sbr.rel (%p354) target = $region24
        $region23: #{bert_contrastive_forward.1} parent=11 // pred_region
          _
        $region24: #{bert_contrastive_forward.1} parent=11 // pred_fallthru
          _
        // Predicated region
        $region25: #{bert_contrastive_forward.1} parent=11 // pred_check
          %p357 = pneg %p213
        $region26: #{bert_contrastive_forward.1} parent=11 // pred_check_branch
          %359 = sbr.rel (%p357) target = $region28
        $region27: #{bert_contrastive_forward.1} parent=11 // pred_region
          _
        $region28: #{bert_contrastive_forward.1} parent=11 // pred_fallthru
          _
        // Predicated region
        $region29: #{bert_contrastive_forward.1} parent=11 // pred_check
          %p360 = pneg %p234
        $region30: #{bert_contrastive_forward.1} parent=11 // pred_check_branch
          %362 = sbr.rel (%p360) target = $region32
        $region31: #{bert_contrastive_forward.1} parent=11 // pred_region
          _
        $region32: #{bert_contrastive_forward.1} parent=11 // pred_fallthru
          _
        // Predicated region
        $region33: #{bert_contrastive_forward.1} parent=11 // pred_check
          %p363 = pneg %p255
        $region34: #{bert_contrastive_forward.1} parent=11 // pred_check_branch
          %365 = sbr.rel (%p363) target = $region36
        $region35: #{bert_contrastive_forward.1} parent=11 // pred_region
          _
        $region36: #{bert_contrastive_forward.1} parent=11 // pred_fallthru
          _
      $region12: #{bert_contrastive_forward.1} parent=5 // pred_fallthru
        _
      %p366 = scmp.lt.s32.totalorder %s25, 2
      // Predicated region
      $region37: #{bert_contrastive_forward.1} parent=5 // pred_check
        %p367 = pneg %p366
      $region38: #{bert_contrastive_forward.1} parent=5 // pred_check_branch
        %369 = sbr.rel (%p367) target = $region40
      $region39: #{bert_contrastive_forward.1} parent=5 // pred_region
        // Predicated region
        $region41: #{bert_contrastive_forward.1} parent=39 // pred_check
          %p370 = pneg %p45
        $region42: #{bert_contrastive_forward.1} parent=39 // pred_check_branch
          %372 = sbr.rel (%p370) target = $region44
        $region43: #{bert_contrastive_forward.1} parent=39 // pred_region
          %p373 = scmp.lt.s32.totalorder %s25, 1
          %s374 = scalar_select %p373, %s25, 1
          %s375 = smul.addr %s374, 8
          %s376 = scalar_lea.vmem %s0, %s375
        $region44: #{bert_contrastive_forward.1} parent=39 // pred_fallthru
          _
        // Predicated region
        $region45: #{bert_contrastive_forward.1} parent=39 // pred_check
          %p377 = pneg %p71
        $region46: #{bert_contrastive_forward.1} parent=39 // pred_check_branch
          %379 = sbr.rel (%p377) target = $region48
        $region47: #{bert_contrastive_forward.1} parent=39 // pred_region
          %p380 = scmp.lt.s32.totalorder %s25, 1
          %s381 = scalar_select %p380, %s25, 1
          %s382 = scalar_lea.vmem %s1, %s381
        $region48: #{bert_contrastive_forward.1} parent=39 // pred_fallthru
          _
        // Predicated region
        $region49: #{bert_contrastive_forward.1} parent=39 // pred_check
          %p383 = pneg %p97
        $region50: #{bert_contrastive_forward.1} parent=39 // pred_check_branch
          %385 = sbr.rel (%p383) target = $region52
        $region51: #{bert_contrastive_forward.1} parent=39 // pred_region
          %p386 = scmp.lt.s32.totalorder %s25, 1
          %s387 = scalar_select %p386, %s25, 1
          %s388 = scalar_lea.vmem %s2, %s387
        $region52: #{bert_contrastive_forward.1} parent=39 // pred_fallthru
          _
        // Predicated region
        $region53: #{bert_contrastive_forward.1} parent=39 // pred_check
          %p389 = pneg %p123
        $region54: #{bert_contrastive_forward.1} parent=39 // pred_check_branch
          %391 = sbr.rel (%p389) target = $region56
        $region55: #{bert_contrastive_forward.1} parent=39 // pred_region
          %p392 = scmp.lt.s32.totalorder %s25, 1
          %s393 = scalar_select %p392, %s25, 1
          %s394 = scalar_lea.vmem %s3, %s393
        $region56: #{bert_contrastive_forward.1} parent=39 // pred_fallthru
          _
      $region40: #{bert_contrastive_forward.1} parent=5 // pred_fallthru
        _
      %p395 = scmp.le.s32.totalorder 1, %s25
      %p396 = scmp.lt.s32.totalorder %s25, 3
      %p397 = pnand %p395, %p396
      %p398 = pneg %p397
      // Predicated region
      $region57: #{bert_contrastive_forward.1} parent=5 // pred_check
        _
      $region58: #{bert_contrastive_forward.1} parent=5 // pred_check_branch
        %400 = sbr.rel (%p397) target = $region60
      $region59: #{bert_contrastive_forward.1} parent=5 // pred_region
        %s401 = ssub.s32 %s25, 1
        %p402 = scmp.lt.s32.totalorder %s30, 1
        %s403 = scalar_select %p402, %s30, 1
        %s404 = smul.addr %s403, 8
        %s405 = scalar_lea.vmem %s0, %s404
        %p406 = pneg %p51
        %p407 = pneg %p48
        %p408 = scmp.lt.s32.totalorder %s30, 1
        %s409 = scalar_select %p408, %s30, 1
        %s410 = scalar_lea.vmem %s1, %s409
        %p411 = pneg %p77
        %p412 = pneg %p74
        %p413 = scmp.lt.s32.totalorder %s30, 1
        %s414 = scalar_select %p413, %s30, 1
        %s415 = scalar_lea.vmem %s2, %s414
        %p416 = pneg %p103
        %p417 = pneg %p100
        %p418 = scmp.lt.s32.totalorder %s30, 1
        %s419 = scalar_select %p418, %s30, 1
        %s420 = scalar_lea.vmem %s3, %s419
        %p421 = pneg %p129
        %p422 = pneg %p126
        %p423 = pneg %p150
        %p424 = pneg %p147
        %p425 = pneg %p171
        %p426 = pneg %p168
        %p427 = pneg %p192
        %p428 = pneg %p189
        %p429 = pneg %p213
        %p430 = pneg %p210
        %p431 = pneg %p234
        %p432 = pneg %p231
        %p433 = pneg %p255
        %p434 = pneg %p252
        %p435 = pneg %p281
        %p436 = pneg %p278
        %s437 = sand.u32 %s268, 1
        %s438 = scalar_lea.sflag [#allocation3], %s437
        %s439 = sand.u32 %s268, 1
        %s440 = scalar_lea.vmem [#allocation2], %s439
        %p441 = pneg %p307
        %p442 = pneg %p304
        %s443 = sand.u32 %s294, 1
        %s444 = scalar_lea.sflag [#allocation5], %s443
        %s445 = sand.u32 %s294, 1
        %s446 = scalar_lea.vmem [#allocation4], %s445
        %p447 = pneg %p333
        %p448 = pneg %p330
        %p449 = scmp.lt.s32.totalorder %s30, 1
        %s450 = scalar_select %p449, %s30, 1
        %s451 = scalar_lea.vmem %s12, %s450
        %p452 = scmp.lt.s32.totalorder %s30, 1
        %s453 = scalar_select %p452, %s30, 1
        %s454 = smul.addr %s453, 8
        %s455 = scalar_lea.vmem %s0, %s454
        %p456 = scmp.lt.s32.totalorder %s30, 1
        %s457 = scalar_select %p456, %s30, 1
        %s458 = scalar_lea.vmem %s1, %s457
        %p459 = scmp.lt.s32.totalorder %s30, 1
        %s460 = scalar_select %p459, %s30, 1
        %s461 = scalar_lea.vmem %s2, %s460
        %p462 = scmp.lt.s32.totalorder %s30, 1
        %s463 = scalar_select %p462, %s30, 1
        %s464 = scalar_lea.vmem %s3, %s463
        %p465 = scmp.lt.s32.totalorder %s30, 1
        %s466 = scalar_select %p465, %s30, 1
        %s467 = scalar_lea.vmem %s12, %s466
        %v469 = vld [vmem:[%s455] sm:$0xff]
        %v470 = vld [vmem:[%s458] sm:$0x1]
        %v471 = vld [vmem:[%s461] sm:$0x1]
        %v472 = vld [vmem:[%s464] sm:$0x1]
        %v473 = vld [vmem:[%s8] sm:$0xff]
        %v474 = vld [vmem:[%s8 + $0x8] sm:$0x1]
        %v475 = vld [vmem:[%s9] sm:$0x1]
        %v476 = vpack.c.bf16 %v469, %v469
        %v477 = vld [vmem:[%s4] sm:$0xf]
        %v478 = vld [vmem:[%s4 + $0x4] sm:$0xf]
        %v479 = vld [vmem:[%s4 + $0x8] sm:$0xf]
        %v480 = vld [vmem:[%s4 + $0xc] sm:$0xf]
        %v485 = vunpack.c.l.b16 %v477
        %v486 = vunpack.c.l.b16 %v478
        %v487 = vunpack.c.l.b16 %v479
        %v488 = vunpack.c.l.b16 %v480
        %v489 = vpack.c.b16 %v486, %v485
        %v490 = vpack.c.b16 %v488, %v487
        %vm493 = vcmask 261120
        %v495 = vsel %vm493, %v476, 0
        %497 = vmatpush.bf16.msra.mxu0 0
        %498 = vmatpush.bf16.msra.mxu0 0
        %499 = vmatpush.bf16.msra.mxu0 0
        %500 = vmatpush.bf16.msra.mxu0 0
        %501 = vmatpush.bf16.msra.mxu0 0
        %502 = vmatpush.bf16.msra.mxu0 0
        %503 = vmatpush.bf16.msra.mxu0 %v490
        %504 = vmatpush.bf16.msra.mxu0 %v489
        %505 = vmatmul.bf16.gmra.mxu0 %v495
        %v506 = vpop.f32.mrf.mxu0
        %v507 = vadd.f32 0.0, %v506
        %v508 = vpop.f32.mrf.mxu0
        %509 = vdwg.mxu0
        %v510 = vperm.slane %v473, 0
        %v511 = vadd.f32 %v507, %v510
        %v512 = vperm.slane %v473, 1
        %514 = vrot.lane.b32.xlu0 %v512, 32
        %v515 = vpop.permute.xlu0 %514
        %v517 = vadd.f32 %v507, %v515
        %v518 = vperm.slane %v473, 2
        %520 = vrot.lane.b32.xlu0 %v518, 64
        %v521 = vpop.permute.xlu0 %520
        %v523 = vadd.f32 %v507, %v521
        %v524 = vpack.c.bf16 %v511, %v511
        %v525 = vpack.c.bf16 %v517, %v517
        %v527 = vunpack.c.l.b16 %v525
        %v528 = vpack.c.b16 %v527, %v527
        %529 = vrot.lane.b32.xlu0 %v528, 96
        %v530 = vpop.permute.xlu0 %529
        %v532 = vsel %vm493, %v524, 0
        %v535 = vsel %vm493, %v530, 0
        %537 = vmatpush.bf16.xpose.msra.mxu0 0
        %538 = vmatpush.bf16.xpose.msra.mxu0 0
        %539 = vmatpush.bf16.xpose.msra.mxu0 0
        %540 = vmatpush.bf16.xpose.msra.mxu0 0
        %541 = vmatpush.bf16.xpose.msra.mxu0 0
        %542 = vmatpush.bf16.xpose.msra.mxu0 0
        %543 = vmatpush.bf16.xpose.msra.mxu0 0
        %544 = vmatpush.bf16.xpose.msra.mxu0 %v535
        %545 = vmatmul.bf16.gmra.mxu0 %v532
        %v546 = vpop.f32.mrf.mxu0
        %v547 = vadd.f32 0.0, %v546
        %v548 = vpop.f32.mrf.mxu0
        %549 = vdwg.mxu0
        %v550 = vmul.f32 %v547, 0.17677669
        %v551 = vsub.f32 1.0, %v470
        %v552 = vmul.f32 %v551, -1e+09
        %v554 = vperm.slane %v552, 0
        %v556 = vadd.f32 %v550, %v554
        %vm557 = vcmask 64512
        %v558 = vsel %vm557, %v556, -inf
        %559 = vmax.xlane.f32.xlu0 %v558
        %v560 = vpop.xlane.xlu0 %559
        %v561 = vsub.f32 %v556, %v560
        %v562 = vmul.f32 %v561, 1.442695
        %v563 = vpow.pop %v562
        %v564 = vsel %vm557, %v563, 0.0
        %565 = vadd.xlane.f32.xlu0 %v564
        %v566 = vpop.xlane.xlu0 %565
        %v567 = vrcp.pop %v566
        %v568 = vmul.f32 %v563, %v567
        %v569 = vpack.c.bf16 %v568, %v568
        %v570 = vpack.c.bf16 %v523, %v523
        %v572 = vunpack.c.l.b16 %v570
        %v573 = vpack.c.b16 %v572, %v572
        %574 = vrot.lane.b32.xlu0 %v573, 64
        %v575 = vpop.permute.xlu0 %574
        %v577 = vsel %vm557, %v569, 0
        %vm579 = vcmask 1043456
        %v581 = vsel %vm579, %v575, 0
        %583 = vmatpush.bf16.msra.mxu0 0
        %584 = vmatpush.bf16.msra.mxu0 0
        %585 = vmatpush.bf16.msra.mxu0 0
        %586 = vmatpush.bf16.msra.mxu0 0
        %587 = vmatpush.bf16.msra.mxu0 0
        %588 = vmatpush.bf16.msra.mxu0 0
        %589 = vmatpush.bf16.msra.mxu0 0
        %590 = vmatpush.bf16.msra.mxu0 %v581
        %591 = vmatmul.bf16.gmra.mxu0 %v577
        %v592 = vpop.f32.mrf.mxu0
        %v593 = vadd.f32 0.0, %v592
        %v594 = vpop.f32.mrf.mxu0
        %595 = vdwg.mxu0
        %v596 = vpack.c.bf16 %v593, %v593
        %v597 = vld [vmem:[%s5] sm:$0xf]
        %v598 = vld [vmem:[%s5 + $0x4] sm:$0xf]
        %v599 = vld [vmem:[%s5 + $0x8] sm:$0xf]
        %v600 = vld [vmem:[%s5 + $0xc] sm:$0xf]
        %v601 = vperm.slane %v473, 3
        %v606 = vunpack.c.l.b16 %v597
        %v607 = vunpack.c.l.b16 %v598
        %v608 = vunpack.c.l.b16 %v599
        %v609 = vunpack.c.l.b16 %v600
        %v610 = vpack.c.b16 %v607, %v606
        %v611 = vpack.c.b16 %v609, %v608
        %v615 = vsel %vm493, %v596, 0
        %617 = vmatpush.bf16.msra.mxu0 0
        %618 = vmatpush.bf16.msra.mxu0 0
        %619 = vmatpush.bf16.msra.mxu0 0
        %620 = vmatpush.bf16.msra.mxu0 0
        %621 = vmatpush.bf16.msra.mxu0 0
        %622 = vmatpush.bf16.msra.mxu0 0
        %623 = vmatpush.bf16.msra.mxu0 %v611
        %624 = vmatpush.bf16.msra.mxu0 %v610
        %625 = vmatmul.bf16.gmra.mxu0 %v615
        %v626 = vpop.f32.mrf.mxu0
        %v627 = vadd.f32 %v601, %v626
        %v628 = vpop.f32.mrf.mxu0
        %629 = vdwg.mxu0
        %v630 = vadd.f32 %v469, %v627
        %v631 = vsel %vm493, %v630, 0.0
        %632 = vadd.xlane.f32.xlu0 %v631
        %v633 = vpop.xlane.xlu0 %632
        %v634 = vrcp.pop 32.0
        %v635 = vmul.f32 32.0, %v634
        %v636 = vsub.f32 1.0, %v635
        %v637 = vmul.f32 %v634, %v636
        %v638 = vadd.f32 %v634, %v637
        %vm639 = vweird.f32 %v634
        %v640 = vsel %vm639, %v634, %v638
        %v641 = vmul.f32 %v633, %v640
        %v642 = vsub.f32 %v630, %v641
        %v643 = vmul.f32 %v642, %v642
        %v644 = vsel %vm493, %v643, 0.0
        %645 = vadd.xlane.f32.xlu0 %v644
        %v646 = vpop.xlane.xlu0 %645
        %v647 = vmul.f32 %v646, %v640
        %v648 = vadd.f32 %v647, 1e-12
        %v649 = vrsqrt.pop %v648
        %v650 = vmul.f32 %v649, %v648
        %v651 = vmul.f32 %v650, %v649
        %v652 = vmul.f32 0.5, %v651
        %v653 = vsub.f32 1.5, %v652
        %v654 = vmul.f32 %v649, %v653
        %vm655 = vweird.f32 %v648
        %vm656 = vweird.f32 %v649
        %vm657 = vmor %vm655, %vm656
        %v658 = vsel %vm657, %v649, %v654
        %v659 = vmul.f32 %v642, %v658
        %v660 = vperm.slane %v473, 4
        %v661 = vmul.f32 %v659, %v660
        %v662 = vperm.slane %v473, 5
        %v663 = vadd.f32 %v661, %v662
        %v664 = vpack.c.bf16 %v663, %v663
        %v665 = vld [vmem:[%s6] sm:$0xf]
        %v666 = vld [vmem:[%s6 + $0x4] sm:$0xf]
        %v667 = vld [vmem:[%s6 + $0x8] sm:$0xf]
        %v668 = vld [vmem:[%s6 + $0xc] sm:$0xf]
        %v670 = vperm.slane %v475, 0
        %v676 = vunpack.c.l.b16 %v665
        %v677 = vunpack.c.l.b16 %v666
        %v678 = vunpack.c.l.b16 %v667
        %v679 = vunpack.c.l.b16 %v668
        %v680 = vpack.c.b16 %v677, %v676
        %v681 = vpack.c.b16 %v679, %v678
        %v685 = vsel %vm493, %v664, 0
        %687 = vmatpush.bf16.msra.mxu0 0
        %688 = vmatpush.bf16.msra.mxu0 0
        %689 = vmatpush.bf16.msra.mxu0 0
        %690 = vmatpush.bf16.msra.mxu0 0
        %691 = vmatpush.bf16.msra.mxu0 0
        %692 = vmatpush.bf16.msra.mxu0 0
        %693 = vmatpush.bf16.msra.mxu0 %v681
        %694 = vmatpush.bf16.msra.mxu0 %v680
        %695 = vmatmul.bf16.gmra.mxu0 %v685
        %v696 = vpop.f32.mrf.mxu0
        %v697 = vadd.f32 %v670, %v696
        %v698 = vpop.f32.mrf.mxu0
        %699 = vdwg.mxu0
        %v700 = vmul.f32 %v697, 0.5
        %v701 = vmul.f32 %v697, 0.044715
        %v702 = vmul.f32 %v701, %v697
        %v703 = vmul.f32 %v702, %v697
        %v704 = vadd.f32 %v697, %v703
        %v705 = vmul.f32 %v704, 0.7978846
        %v706 = vtanh.pop %v705
        %v707 = vadd.f32 %v706, 1.0
        %v708 = vmul.f32 %v700, %v707
        %v709 = vpack.c.bf16 %v708, %v708
        %v710 = vld [vmem:[%s7] sm:$0xf]
        %v711 = vld [vmem:[%s7 + $0x4] sm:$0xf]
        %v712 = vld [vmem:[%s7 + $0x8] sm:$0xf]
        %v713 = vld [vmem:[%s7 + $0xc] sm:$0xf]
        %v714 = vld [vmem:[%s7 + $0x10] sm:$0xf]
        %v715 = vld [vmem:[%s7 + $0x14] sm:$0xf]
        %v716 = vld [vmem:[%s7 + $0x18] sm:$0xf]
        %v717 = vld [vmem:[%s7 + $0x1c] sm:$0xf]
        %v718 = vld [vmem:[%s7 + $0x20] sm:$0xf]
        %v719 = vld [vmem:[%s7 + $0x24] sm:$0xf]
        %v720 = vld [vmem:[%s7 + $0x28] sm:$0xf]
        %v721 = vld [vmem:[%s7 + $0x2c] sm:$0xf]
        %v722 = vld [vmem:[%s7 + $0x30] sm:$0xf]
        %v723 = vld [vmem:[%s7 + $0x34] sm:$0xf]
        %v724 = vld [vmem:[%s7 + $0x38] sm:$0xf]
        %v725 = vld [vmem:[%s7 + $0x3c] sm:$0xf]
        %v726 = vperm.slane %v473, 6
        %v743 = vunpack.c.l.b16 %v710
        %v744 = vunpack.c.l.b16 %v711
        %v745 = vunpack.c.l.b16 %v712
        %v746 = vunpack.c.l.b16 %v713
        %v747 = vunpack.c.l.b16 %v714
        %v748 = vunpack.c.l.b16 %v715
        %v749 = vunpack.c.l.b16 %v716
        %v750 = vunpack.c.l.b16 %v717
        %v751 = vunpack.c.l.b16 %v718
        %v752 = vunpack.c.l.b16 %v719
        %v753 = vunpack.c.l.b16 %v720
        %v754 = vunpack.c.l.b16 %v721
        %v755 = vunpack.c.l.b16 %v722
        %v756 = vunpack.c.l.b16 %v723
        %v757 = vunpack.c.l.b16 %v724
        %v758 = vunpack.c.l.b16 %v725
        %v759 = vpack.c.b16 %v744, %v743
        %v760 = vpack.c.b16 %v746, %v745
        %v761 = vpack.c.b16 %v748, %v747
        %v762 = vpack.c.b16 %v750, %v749
        %v763 = vpack.c.b16 %v752, %v751
        %v764 = vpack.c.b16 %v754, %v753
        %v765 = vpack.c.b16 %v756, %v755
        %v766 = vpack.c.b16 %v758, %v757
        %775 = vmatpush.bf16.msra.mxu0 %v766
        %776 = vmatpush.bf16.msra.mxu0 %v765
        %777 = vmatpush.bf16.msra.mxu0 %v764
        %778 = vmatpush.bf16.msra.mxu0 %v763
        %779 = vmatpush.bf16.msra.mxu0 %v762
        %780 = vmatpush.bf16.msra.mxu0 %v761
        %781 = vmatpush.bf16.msra.mxu0 %v760
        %782 = vmatpush.bf16.msra.mxu0 %v759
        %783 = vmatmul.bf16.gmra.mxu0 %v709
        %v784 = vpop.f32.mrf.mxu0
        %v785 = vadd.f32 %v726, %v784
        %v786 = vpop.f32.mrf.mxu0
        %787 = vdwg.mxu0
        %v788 = vadd.f32 %v663, %v785
        %v789 = vsel %vm493, %v788, 0.0
        %790 = vadd.xlane.f32.xlu0 %v789
        %v791 = vpop.xlane.xlu0 %790
        %v792 = vmul.f32 %v791, %v640
        %v793 = vsub.f32 %v788, %v792
        %v794 = vmul.f32 %v793, %v793
        %v795 = vsel %vm493, %v794, 0.0
        %796 = vadd.xlane.f32.xlu0 %v795
        %v797 = vpop.xlane.xlu0 %796
        %v798 = vmul.f32 %v797, %v640
        %v799 = vadd.f32 %v798, 1e-12
        %v800 = vrsqrt.pop %v799
        %v801 = vmul.f32 %v800, %v799
        %v802 = vmul.f32 %v801, %v800
        %v803 = vmul.f32 0.5, %v802
        %v804 = vsub.f32 1.5, %v803
        %v805 = vmul.f32 %v800, %v804
        %vm806 = vweird.f32 %v799
        %vm807 = vweird.f32 %v800
        %vm808 = vmor %vm806, %vm807
        %v809 = vsel %vm808, %v800, %v805
        %v810 = vmul.f32 %v793, %v809
        %v811 = vperm.slane %v473, 7
        %v812 = vmul.f32 %v810, %v811
        %v813 = vperm.slane %v474, 0
        %v814 = vadd.f32 %v812, %v813
        %v815 = vlaneseq
        %v816 = vand.u32 %v815, 127
        %817 = vset.pattern.permute.xlu0 0
        %818 = vperm.xlu0 %817, %v471
        %v819 = vpop.permute.xlu0 %818
        %v820 = vperm.slane %v819, 0
        %vm821 = vcmp.lt.s32.totalorder %v816, %v820
        %v822 = vsel %vm821, 1, 0
        %v823 = vcvt.s32.f32 %v822
        %v824 = vsub.f32 1.0, %v823
        %v825 = vcvt.s32.f32 %v471
        %v826 = vmax.f32 %v825, 1.0
        %v827 = vsub.f32 8.0, %v825
        %v828 = vmax.f32 %v827, 1.0
        %v830 = vsel %vm557, %v823, 0
        %832 = vmatpush.msra.mxu0 0.0
        %833 = vmatpush.msra.mxu0 0.0
        %834 = vmatpush.msra.mxu0 0.0
        %835 = vmatpush.msra.mxu0 0.0
        %836 = vmatpush.msra.mxu0 0.0
        %837 = vmatpush.msra.mxu0 0.0
        %838 = vmatpush.msra.mxu0 0.0
        %839 = vmatpush.msra.mxu0 0.0
        %840 = vmatpush.msra.mxu0 0.0
        %841 = vmatpush.msra.mxu0 0.0
        %842 = vmatpush.msra.mxu0 0.0
        %843 = vmatpush.msra.mxu0 0.0
        %844 = vmatpush.msra.mxu0 0.0
        %845 = vmatpush.msra.mxu0 0.0
        %846 = vmatpush.msra.mxu0 0.0
        %847 = vmatpush.msra.mxu0 %v814
        %848 = vmatmul.f32.gmra.mxu0 %v830
        %v849 = vpop.f32.mrf.mxu0
        %v850 = vadd.f32 0.0, %v849
        %851 = vdwg.mxu0
        %v852 = vrcp.pop %v826
        %854 = vset.pattern.permute.xlu0 0
        %855 = vperm.xlu0 %854, %v852
        %v856 = vpop.permute.xlu0 %855
        %v858 = vperm.slane %v856, 0
        %v859 = vmul.f32 %v850, %v858
        %v861 = vsel %vm557, %v824, 0
        %863 = vmatpush.msra.mxu0 0.0
        %864 = vmatpush.msra.mxu0 0.0
        %865 = vmatpush.msra.mxu0 0.0
        %866 = vmatpush.msra.mxu0 0.0
        %867 = vmatpush.msra.mxu0 0.0
        %868 = vmatpush.msra.mxu0 0.0
        %869 = vmatpush.msra.mxu0 0.0
        %870 = vmatpush.msra.mxu0 0.0
        %871 = vmatpush.msra.mxu0 0.0
        %872 = vmatpush.msra.mxu0 0.0
        %873 = vmatpush.msra.mxu0 0.0
        %874 = vmatpush.msra.mxu0 0.0
        %875 = vmatpush.msra.mxu0 0.0
        %876 = vmatpush.msra.mxu0 0.0
        %877 = vmatpush.msra.mxu0 0.0
        %878 = vmatpush.msra.mxu0 %v814
        %879 = vmatmul.f32.gmra.mxu0 %v861
        %v880 = vpop.f32.mrf.mxu0
        %v881 = vadd.f32 0.0, %v880
        %882 = vdwg.mxu0
        %v883 = vrcp.pop %v828
        %885 = vset.pattern.permute.xlu0 0
        %886 = vperm.xlu0 %885, %v883
        %v887 = vpop.permute.xlu0 %886
        %v889 = vperm.slane %v887, 0
        %v890 = vmul.f32 %v881, %v889
        %v891 = vsub.f32 %v859, %v890
        %v892 = vadd.f32 %v891, 1e-06
        %v893 = vmul.f32 %v892, %v892
        %vm894 = vcmask 253952
        %v895 = vsel %vm894, %v893, 0.0
        %896 = vadd.xlane.f32.xlu0 %v895
        %v897 = vpop.xlane.xlu0 %896
        %v898 = vrsqrt.pop %v897
        %v899 = vmul.f32 %v898, %v897
        %v900 = vmul.f32 %v899, %v898
        %v901 = vmul.f32 0.5, %v900
        %v902 = vsub.f32 1.5, %v901
        %v903 = vmul.f32 %v898, %v902
        %v904 = vmul.f32 %v897, %v903
        %vm905 = vcmp.eq.f32.partialorder %v897, inf
        %v906 = vsel %vm905, %v897, %v904
        %vm907 = vcmp.eq.f32.partialorder %v897, 0.0
        %v908 = vand.u32 %v897, 2147483648
        %v909 = vsel %vm907, %v908, %v906
        %v910 = vsub.f32 1.0, %v909
        %v911 = vmax.f32 %v910, 0.0
        %v912 = vmul.f32 %v472, %v897
        %v913 = vsub.f32 1.0, %v472
        %v914 = vmul.f32 %v913, %v911
        %v915 = vmul.f32 %v914, %v911
        %v916 = vadd.f32 %v912, %v915
        %917 = vst.msk [vmem:[%s440] sm:$0x1] %vm894, %v859
        %918 = vst.msk [vmem:[%s446] sm:$0x1] %vm894, %v890
        %vm919 = vcmask 0
        %920 = vst.msk [vmem:[%s467] sm:$0x1] %vm919, %v916
        %s921 = sand.u32 %s268, 1
        %s922 = scalar_lea.sflag [#allocation3], %s921
        %s923 = sand.u32 %s268, 1
        %s924 = scalar_lea.vmem [#allocation2], %s923
        %s925 = sand.u32 %s294, 1
        %s926 = scalar_lea.sflag [#allocation5], %s925
        %s927 = sand.u32 %s294, 1
        %s928 = scalar_lea.vmem [#allocation4], %s927
        %p929 = scmp.lt.s32.totalorder %s30, 1
        %s930 = scalar_select %p929, %s30, 1
        %s931 = scalar_lea.vmem %s12, %s930
        // Predicated region
        $region61: #{bert_contrastive_forward.1} parent=59 // pred_check
          %p932 = pneg %p278
        $region62: #{bert_contrastive_forward.1} parent=59 // pred_check_branch
          %934 = sbr.rel (%p932) target = $region64
        $region63: #{bert_contrastive_forward.1} parent=59 // pred_region
          %936 = vsyncadd %s922, 0
          %s937 = scalar_lea.hbm %s10, %s30
          %s939 = sshll.u32 %s924, 4
          %s940 = int_to_ptr.vmem [resolvable:$true] %s939
          %s941 = sshll.u32 %s937, 4
          %s942 = int_to_ptr.hbm [resolvable:$true] %s941
          %944 = dma.vmem_to_hbm [thread:$0]  %s940, 16, %s942, %s922
        $region64: #{bert_contrastive_forward.1} parent=59 // pred_fallthru
          _
        // Predicated region
        $region65: #{bert_contrastive_forward.1} parent=59 // pred_check
          %p945 = pneg %p304
        $region66: #{bert_contrastive_forward.1} parent=59 // pred_check_branch
          %947 = sbr.rel (%p945) target = $region68
        $region67: #{bert_contrastive_forward.1} parent=59 // pred_region
          %949 = vsyncadd %s926, 0
          %s950 = scalar_lea.hbm %s11, %s30
          %s952 = sshll.u32 %s928, 4
          %s953 = int_to_ptr.vmem [resolvable:$true] %s952
          %s954 = sshll.u32 %s950, 4
          %s955 = int_to_ptr.hbm [resolvable:$true] %s954
          %957 = dma.vmem_to_hbm [thread:$0]  %s953, 16, %s955, %s926
        $region68: #{bert_contrastive_forward.1} parent=59 // pred_fallthru
          _
        // Predicated region
        $region69: #{bert_contrastive_forward.1} parent=59 // pred_check
          %p958 = pneg %p330
        $region70: #{bert_contrastive_forward.1} parent=59 // pred_check_branch
          %960 = sbr.rel (%p958) target = $region72
        $region71: #{bert_contrastive_forward.1} parent=59 // pred_region
          _
        $region72: #{bert_contrastive_forward.1} parent=59 // pred_fallthru
          _
      $region60: #{bert_contrastive_forward.1} parent=5 // pred_fallthru
        _
      %p961 = scmp.le.s32.totalorder 2, %s25
      // Predicated region
      $region73: #{bert_contrastive_forward.1} parent=5 // pred_check
        %p962 = pneg %p961
      $region74: #{bert_contrastive_forward.1} parent=5 // pred_check_branch
        %964 = sbr.rel (%p962) target = $region76
      $region75: #{bert_contrastive_forward.1} parent=5 // pred_region
        %s965 = ssub.s32 %s25, 2
        // Predicated region
        $region77: #{bert_contrastive_forward.1} parent=75 // pred_check
          %p966 = pneg %p284
        $region78: #{bert_contrastive_forward.1} parent=75 // pred_check_branch
          %968 = sbr.rel (%p966) target = $region80
        $region79: #{bert_contrastive_forward.1} parent=75 // pred_region
          %s969 = sand.u32 %s269, 1
          %s970 = scalar_lea.sflag [#allocation3], %s969
          %s971 = sand.u32 %s269, 1
          %s972 = scalar_lea.vmem [#allocation2], %s971
          %974 = dma.done %s970, 16
        $region80: #{bert_contrastive_forward.1} parent=75 // pred_fallthru
          _
        // Predicated region
        $region81: #{bert_contrastive_forward.1} parent=75 // pred_check
          %p975 = pneg %p310
        $region82: #{bert_contrastive_forward.1} parent=75 // pred_check_branch
          %977 = sbr.rel (%p975) target = $region84
        $region83: #{bert_contrastive_forward.1} parent=75 // pred_region
          %s978 = sand.u32 %s295, 1
          %s979 = scalar_lea.sflag [#allocation5], %s978
          %s980 = sand.u32 %s295, 1
          %s981 = scalar_lea.vmem [#allocation4], %s980
          %983 = dma.done %s979, 16
        $region84: #{bert_contrastive_forward.1} parent=75 // pred_fallthru
          _
        // Predicated region
        $region85: #{bert_contrastive_forward.1} parent=75 // pred_check
          %p984 = pneg %p336
        $region86: #{bert_contrastive_forward.1} parent=75 // pred_check_branch
          %986 = sbr.rel (%p984) target = $region88
        $region87: #{bert_contrastive_forward.1} parent=75 // pred_region
          %p987 = scmp.lt.s32.totalorder %s31, 1
          %s988 = scalar_select %p987, %s31, 1
          %s989 = scalar_lea.vmem %s12, %s988
        $region88: #{bert_contrastive_forward.1} parent=75 // pred_fallthru
          _
      $region76: #{bert_contrastive_forward.1} parent=5 // pred_fallthru
        _
    $region6: #{bert_contrastive_forward.1} parent=1 // loop_footer
      %s29 = sadd.s32 1, %s25
    $region7: #{bert_contrastive_forward.1} parent=1 // loop_footer_branch
      %24 = sbr.rel target = $region3
    $region8: #{bert_contrastive_forward.1} parent=1 // loop_exit
      _
    %990 = vsyncpa [#allocation3], 1
    %s991 = scalar_lea.sflag [#allocation3], 1
    %992 = vsyncpa %s991, 1
    %993 = vsyncpa [#allocation5], 1
    %s994 = scalar_lea.sflag [#allocation5], 1
    %995 = vsyncpa %s994, 1

</llo_original>
